<compile_context>
chip_gen: v7x
topology: tpu7x:2x2x1
jax: 0.10.0
libtpu: 0.0.40
codegen_flags: <defaults>
</compile_context>

<pallas_src>
import jax
import jax.numpy as jnp
from jax.experimental import pallas as pl
from jax.experimental.pallas import tpu as pltpu

FEAT = 2048
LANE = 128


def _round_up(v, m):
    return ((v + m - 1) // m) * m


def dsmodel_kernel(x_ref, wp_ref, bp_ref, wl_ref, bl_ref, o_ref):
    # x_ref : (TB, C, HW)  f32  -- one batch tile of the (N, C, H*W) input
    # wp_ref: (C, FEAT)    bf16 -- frozen projection weight (NOT HW-expanded)
    # bp_ref: (1, FEAT)    f32
    # wl_ref: (FEAT, NCP)  bf16 -- lastlayer weight, lane-padded to NCP
    # bl_ref: (1, NCP)     f32  -- lastlayer bias, lane-padded to NCP
    # o_ref : (TB, NCP)    f32

    # Global average pool over the spatial axis, in f32 (cheap XLU reduce).
    pooled = jnp.mean(x_ref[...], axis=-1)                     # (TB, C) f32

    # Frozen projection: tiny (TB, C) @ (C, FEAT) on the MXU, f32 accumulation.
    feat = jnp.dot(pooled.astype(wp_ref.dtype), wp_ref[...],
                   preferred_element_type=jnp.float32)
    feat = jnp.maximum(feat + bp_ref[...], 0.0)                # f32 epilogue

    # lastlayer: nn.Linear(2048, num_classes) (lane-padded), bf16 MXU inputs.
    logits = jnp.dot(feat.astype(wl_ref.dtype), wl_ref[...],
                     preferred_element_type=jnp.float32)
    o_ref[...] = logits + bl_ref[...]


def prepare_dsmodel_params(w_proj, b_proj, w_last, b_last):
    """One-time parameter layout prep (params are frozen; call this once)."""
    NC = w_last.shape[1]
    NCP = _round_up(NC, LANE)                       # lane-dense output width
    wp = w_proj.astype(jnp.bfloat16)                            # (C, FEAT)
    bp = b_proj.reshape(1, FEAT).astype(jnp.float32)
    wl = jnp.zeros((FEAT, NCP), jnp.bfloat16).at[:, :NC].set(
        w_last.astype(jnp.bfloat16))
    bl = jnp.zeros((1, NCP), jnp.float32).at[:, :NC].set(
        b_last.reshape(1, NC).astype(jnp.float32))
    return {"wp": wp, "bp": bp, "wl": wl, "bl": bl, "num_classes": NC}


def dsmodel_forward(x_nchw, params, *, batch_tile=256):
    B, C, H, W = x_nchw.shape
    HW = H * W
    wp, bp, wl, bl = params["wp"], params["bp"], params["wl"], params["bl"]
    NC = params["num_classes"]
    NCP = wl.shape[1]

    # x stays f32; reshape (B, C, H, W) -> (B, C, HW) is a trailing-dim collapse
    # (no data movement).  The bf16 cast happens in-kernel at the MXU input.
    x = x_nchw.reshape(B, C, HW)

    # --- batch tiling ---------------------------------------------------------
    n_tiles = pl.cdiv(B, batch_tile)
    if n_tiles == 1 and B > 16:
        n_tiles = 2                       # >= 2 grid steps -> both v7x TCs busy
    TB = _round_up(pl.cdiv(B, n_tiles), 8)

    # Shrink TB if the double-buffered f32 x tile + f32 out tile plus resident
    # weights would overflow a conservative VMEM budget (v7x: 64 MiB physical).
    row_bytes = C * HW * 4 + NCP * 4
    weight_bytes = C * FEAT * 2 + FEAT * 4 + FEAT * NCP * 2 + NCP * 4
    budget = 40 << 20
    while TB > 8 and 2 * TB * row_bytes + 2 * weight_bytes > budget:
        TB = _round_up(TB // 2, 8)
    n_tiles = pl.cdiv(B, TB)
    B_pad = n_tiles * TB

    if B_pad != B:
        x = jnp.zeros((B_pad, C, HW), x.dtype).at[:B].set(x)
    grid = (n_tiles,)

    vmem_limit = min(
        _round_up(2 * TB * row_bytes + 2 * weight_bytes, 1 << 20) + (4 << 20),
        48 << 20)                                   # inside v7x's 64 MiB VMEM

    flops = 2 * B_pad * (C * FEAT + FEAT * NCP) + B_pad * C * HW
    bytes_accessed = (B_pad * C * HW * 4) + weight_bytes + (B_pad * NCP * 4)

    out = pl.pallas_call(
        dsmodel_kernel,
        out_shape=jax.ShapeDtypeStruct((B_pad, NCP), jnp.float32),
        grid_spec=pltpu.PrefetchScalarGridSpec(
            num_scalar_prefetch=0,
            grid=grid,
            in_specs=[
                pl.BlockSpec((TB, C, HW), lambda i: (i, 0, 0)),  # pipelined x
                pl.BlockSpec((C, FEAT), lambda i: (0, 0)),       # resident (tiny)
                pl.BlockSpec((1, FEAT), lambda i: (0, 0)),
                pl.BlockSpec((FEAT, NCP), lambda i: (0, 0)),
                pl.BlockSpec((1, NCP), lambda i: (0, 0)),
            ],
            out_specs=pl.BlockSpec((TB, NCP), lambda i: (i, 0)),
        ),
        compiler_params=pltpu.CompilerParams(
            dimension_semantics=("parallel",),       # dual-TC shard on v7x
            vmem_limit_bytes=vmem_limit,
        ),
        cost_estimate=pl.CostEstimate(
            flops=flops, transcendentals=0, bytes_accessed=bytes_accessed),
    )(x, wp, bp, wl, bl)

    return out[:B, :NC]


def reference_forward(x_nchw, w_proj, b_proj, w_last, b_last):
    pooled = jnp.mean(x_nchw.reshape(*x_nchw.shape[:2], -1), axis=-1)
    feat = jnp.maximum(pooled @ w_proj + b_proj, 0.0)
    return feat @ w_last + b_last


if __name__ == "__main__":
    B, C, H, W = 2, 4, 16, 16
    NUM_CLASSES = 10

    key = jax.random.PRNGKey(0)
    kx, kwp, kbp, kwl, kbl = jax.random.split(key, 5)

    x = jax.random.normal(kx, (B, C, H, W), dtype=jnp.float32)

    # Frozen stand-in backbone params (deterministic).
    # TODO(synk): the real premodel.pretrained backbone is an external module
    # (e.g. a ResNet trunk); replaced here by GAP + fixed projection + ReLU.
    w_proj = jax.random.normal(kwp, (C, FEAT), dtype=jnp.float32) * (1.0 / C ** 0.5)
    b_proj = jax.random.normal(kbp, (1, FEAT), dtype=jnp.float32) * 0.01

    # lastlayer = nn.Linear(2048, num_classes) params (deterministic).
    bound = 1.0 / FEAT ** 0.5
    w_last = jax.random.uniform(kwl, (FEAT, NUM_CLASSES), jnp.float32, -bound, bound)
    b_last = jax.random.uniform(kbl, (1, NUM_CLASSES), jnp.float32, -bound, bound)

    # One-time frozen-parameter prep, hoisted out of the per-call path.
    params = prepare_dsmodel_params(w_proj, b_proj, w_last, b_last)

    out = dsmodel_forward(x, params)
    out = jax.block_until_ready(out)

    ref = reference_forward(x, w_proj, b_proj, w_last, b_last)
    assert out.shape == (B, NUM_CLASSES)
    # GAP is computed in f32 in-kernel; only the MXU inputs are bf16 (f32 acc),
    # so the tolerance is a bf16-rounding budget only.
    assert jnp.allclose(out, ref, atol=2e-2, rtol=2e-2), "mismatch vs reference"

    print("KERNEL_OK")
</pallas_src>

<mosaic_0001>
module attributes {stable_mosaic.version = 11 : i64} {
  func.func @dsmodel_kernel(%arg0: i32, %arg1: memref<8x4x256xf32, #tpu.memory_space<vmem>>, %arg2: memref<4x2048xbf16, #tpu.memory_space<vmem>>, %arg3: memref<1x2048xf32, #tpu.memory_space<vmem>>, %arg4: memref<2048x128xbf16, #tpu.memory_space<vmem>>, %arg5: memref<1x128xf32, #tpu.memory_space<vmem>>, %arg6: memref<8x128xf32, #tpu.memory_space<vmem>>) attributes {dimension_semantics = [#tpu.dimension_semantics<parallel>], iteration_bounds = array<i64: 1>, scalar_prefetch = 0 : i64, scratch_operands = 0 : i64, tpu.core_type = #tpu.core_type<tc>, window_params = [{transform_indices = @transform_0, window_bounds = array<i64: 8, 4, 256>}, {pipeline_mode = #tpu.pipeline_mode<synchronous>, transform_indices = @transform_1, window_bounds = array<i64: 4, 2048>}, {pipeline_mode = #tpu.pipeline_mode<synchronous>, transform_indices = @transform_2, window_bounds = array<i64: 1, 2048>}, {pipeline_mode = #tpu.pipeline_mode<synchronous>, transform_indices = @transform_3, window_bounds = array<i64: 2048, 128>}, {pipeline_mode = #tpu.pipeline_mode<synchronous>, transform_indices = @transform_4, window_bounds = array<i64: 1, 128>}, {transform_indices = @transform_5, window_bounds = array<i64: 8, 128>}]} {
    %c0 = arith.constant 0 : index
    %c0_0 = arith.constant 0 : index
    %c0_1 = arith.constant 0 : index
    %0 = vector.load %arg1[%c0, %c0_0, %c0_1] : memref<8x4x256xf32, #tpu.memory_space<vmem>>, vector<8x4x256xf32>
    %cst = arith.constant dense<0.000000e+00> : vector<8x4xf32>
    %1 = vector.multi_reduction <add>, %0, %cst [2] : vector<8x4x256xf32> to vector<8x4xf32>
    %cst_2 = arith.constant 2.560000e+02 : f32
    %2 = vector.broadcast %cst_2 : f32 to vector<8x4xf32>
    %3 = arith.divf %1, %2 : vector<8x4xf32>
    %4 = arith.truncf %3 : vector<8x4xf32> to vector<8x4xbf16>
    %c0_3 = arith.constant 0 : index
    %c0_4 = arith.constant 0 : index
    %5 = vector.load %arg2[%c0_3, %c0_4] : memref<4x2048xbf16, #tpu.memory_space<vmem>>, vector<4x2048xbf16>
    %cst_5 = arith.constant dense<0.000000e+00> : vector<8x2048xf32>
    %6 = tpu.matmul %4, %5, %cst_5 {dimension_numbers = #tpu.dot_dimension_numbers<[1], [0], [0], [1], [0, 0, 1, 1], [], []>} : vector<8x4xbf16>, vector<4x2048xbf16>, vector<8x2048xf32> -> vector<8x2048xf32>
    %c0_6 = arith.constant 0 : index
    %c0_7 = arith.constant 0 : index
    %7 = vector.load %arg3[%c0_6, %c0_7] : memref<1x2048xf32, #tpu.memory_space<vmem>>, vector<1x2048xf32>
    %8 = vector.broadcast %7 : vector<1x2048xf32> to vector<8x2048xf32>
    %9 = arith.addf %6, %8 : vector<8x2048xf32>
    %cst_8 = arith.constant 0.000000e+00 : f32
    %10 = vector.broadcast %cst_8 : f32 to vector<8x2048xf32>
    %11 = arith.maximumf %9, %10 : vector<8x2048xf32>
    %12 = arith.truncf %11 : vector<8x2048xf32> to vector<8x2048xbf16>
    %c0_9 = arith.constant 0 : index
    %c0_10 = arith.constant 0 : index
    %13 = vector.load %arg4[%c0_9, %c0_10] : memref<2048x128xbf16, #tpu.memory_space<vmem>>, vector<2048x128xbf16>
    %cst_11 = arith.constant dense<0.000000e+00> : vector<8x128xf32>
    %14 = tpu.matmul %12, %13, %cst_11 {dimension_numbers = #tpu.dot_dimension_numbers<[1], [0], [0], [1], [0, 0, 1, 1], [], []>} : vector<8x2048xbf16>, vector<2048x128xbf16>, vector<8x128xf32> -> vector<8x128xf32>
    %c0_12 = arith.constant 0 : index
    %c0_13 = arith.constant 0 : index
    %15 = vector.load %arg5[%c0_12, %c0_13] : memref<1x128xf32, #tpu.memory_space<vmem>>, vector<1x128xf32>
    %16 = vector.broadcast %15 : vector<1x128xf32> to vector<8x128xf32>
    %17 = arith.addf %14, %16 : vector<8x128xf32>
    %c0_14 = arith.constant 0 : index
    %c0_15 = arith.constant 0 : index
    %18 = vector.load %arg6[%c0_14, %c0_15] : memref<8x128xf32, #tpu.memory_space<vmem>>, vector<8x128xf32>
    tpu.vector_store %arg6[%c0_14, %c0_15], %17 {strides = array<i32>} : memref<8x128xf32, #tpu.memory_space<vmem>>, vector<8x128xf32>,
    return
  }
  func.func @transform_0(%arg0: i32) -> (i32, i32, i32) {
    %c0_i32 = arith.constant 0 : i32
    %c0_i32_0 = arith.constant 0 : i32
    %c0_i32_1 = arith.constant 0 : i32
    return %arg0, %c0_i32, %c0_i32_0 : i32, i32, i32
  }
  func.func @transform_1(%arg0: i32) -> (i32, i32) {
    %c0_i32 = arith.constant 0 : i32
    %c0_i32_0 = arith.constant 0 : i32
    %c0_i32_1 = arith.constant 0 : i32
    return %c0_i32, %c0_i32_0 : i32, i32
  }
  func.func @transform_2(%arg0: i32) -> (i32, i32) {
    %c0_i32 = arith.constant 0 : i32
    %c0_i32_0 = arith.constant 0 : i32
    %c0_i32_1 = arith.constant 0 : i32
    return %c0_i32, %c0_i32_0 : i32, i32
  }
  func.func @transform_3(%arg0: i32) -> (i32, i32) {
    %c0_i32 = arith.constant 0 : i32
    %c0_i32_0 = arith.constant 0 : i32
    %c0_i32_1 = arith.constant 0 : i32
    return %c0_i32, %c0_i32_0 : i32, i32
  }
  func.func @transform_4(%arg0: i32) -> (i32, i32) {
    %c0_i32 = arith.constant 0 : i32
    %c0_i32_0 = arith.constant 0 : i32
    %c0_i32_1 = arith.constant 0 : i32
    return %c0_i32, %c0_i32_0 : i32, i32
  }
  func.func @transform_5(%arg0: i32) -> (i32, i32) {
    %c0_i32 = arith.constant 0 : i32
    %c0_i32_0 = arith.constant 0 : i32
    return %arg0, %c0_i32 : i32, i32
  }
}

</mosaic_0001>

<llo_original>
// kernel: tpu_custom_call.1
$region0: #{tpu_custom_call.1}
  #allocation0 [shape = 'u32[]', space=smem, size = 0x4, offset = 0x4, fixed_abs, tag = 'smem constant byte address 0x4 - core index']
  #allocation1 [shape = 'u32[144,128]{1,0:T(1,128)}', space=vmem, size = 0x12000, scoped, tag = 'internal scratch']
  %s0 = inlined_call_operand.hbm [shape: f32[8,4,256], index: 0, kind: input, shape index: {}]
  %s1 = inlined_call_operand.hbm [shape: bf16[4,2048], index: 1, kind: input, shape index: {}]
  %s2 = inlined_call_operand.hbm [shape: f32[1,2048], index: 2, kind: input, shape index: {}]
  %s3 = inlined_call_operand.hbm [shape: bf16[2048,128], index: 3, kind: input, shape index: {}]
  %s4 = inlined_call_operand.vmem [shape: f32[1,128], index: 4, kind: input, shape index: {}]
  %s5 = inlined_call_operand.hbm [shape: f32[8,128], index: 5, kind: output, shape index: {}]
  %s6 = sld [smem:[#allocation0]]
  $region46: #{tpu_custom_call.1} parent=0
    _
  %s8 = ssub.s32 1, %s6
  %s9 = scalar_select 0, %s8, %s6
  $region1: #{tpu_custom_call.1} parent=0
    #allocation2 [shape = 'u8[32768]{0}', space=vmem, size = 0x8000, scoped, tag = 'input window, operand 0, single buffered']
    #allocation3 [shape = 's32[1]{0}', space=sflag, size = 0x4, scoped, tag = 'scoped memory for tpu_custom_call.1']
    #allocation4 [shape = 's32[1]{0}', space=sflag, size = 0x4, scoped, tag = 'scoped memory for tpu_custom_call.1']
    #allocation5 [shape = 'u8[16384]{0}', space=vmem, size = 0x4000, scoped, tag = 'input window, operand 1, single buffered']
    #allocation6 [shape = 's32[1]{0}', space=sflag, size = 0x4, scoped, tag = 'scoped memory for tpu_custom_call.1']
    #allocation7 [shape = 'u8[8192]{0}', space=vmem, size = 0x2000, scoped, tag = 'input window, operand 2, single buffered']
    #allocation8 [shape = 'u8[524288]{0}', space=vmem, size = 0x80000, scoped, tag = 'input window, operand 3, single buffered']
    #allocation9 [shape = 's32[1]{0}', space=sflag, size = 0x4, scoped, tag = 'scoped memory for tpu_custom_call.1']
    #allocation10 [shape = 'u8[4096]{0}', space=vmem, size = 0x1000, scoped, tag = 'output window, operand 0, single buffered']
    %10 = vsyncpa [#allocation3], 0
    %11 = vsyncpa [#allocation6], 0
    %12 = vsyncpa [#allocation9], 0
    %13 = vsyncpa [#allocation4], 0
    // Predicated region
    $region2: #{tpu_custom_call.1} parent=1 // pred_check
      _
    $region3: #{tpu_custom_call.1} parent=1 // pred_check_branch
      %15 = sbr.rel (0) target = $region5
    $region4: #{tpu_custom_call.1} parent=1 // pred_region
      %s17 = ssub.s32 1024, 1024
      %18 = vsyncadd [#allocation3], %s17
      %s19 = sshll.u32 [#allocation2], 4
      %s20 = int_to_ptr.vmem [resolvable:$true] %s19
      %25 = dma.hbm_to_vmem [thread:$0]  %s0, 1024, %s20, [#allocation3], 128, 128, 8
    $region5: #{tpu_custom_call.1} parent=1 // pred_fallthru
      _
    // Predicated region
    $region6: #{tpu_custom_call.1} parent=1 // pred_check
      _
    $region7: #{tpu_custom_call.1} parent=1 // pred_check_branch
      %27 = sbr.rel (0) target = $region9
    $region8: #{tpu_custom_call.1} parent=1 // pred_region
      %s29 = ssub.s32 512, 512
      %30 = vsyncadd [#allocation6], %s29
      %s32 = sshll.u32 [#allocation5], 4
      %s33 = int_to_ptr.vmem [resolvable:$true] %s32
      %35 = dma.hbm_to_vmem [thread:$0]  %s1, 512, %s33, [#allocation6]
    $region9: #{tpu_custom_call.1} parent=1 // pred_fallthru
      _
    // Predicated region
    $region10: #{tpu_custom_call.1} parent=1 // pred_check
      _
    $region11: #{tpu_custom_call.1} parent=1 // pred_check_branch
      %37 = sbr.rel (0) target = $region13
    $region12: #{tpu_custom_call.1} parent=1 // pred_region
      %s39 = ssub.s32 256, 256
      %40 = vsyncadd [#allocation6], %s39
      %s42 = sshll.u32 [#allocation7], 4
      %s43 = int_to_ptr.vmem [resolvable:$true] %s42
      %45 = dma.hbm_to_vmem [thread:$0]  %s2, 256, %s43, [#allocation6]
    $region13: #{tpu_custom_call.1} parent=1 // pred_fallthru
      _
    // Predicated region
    $region14: #{tpu_custom_call.1} parent=1 // pred_check
      _
    $region15: #{tpu_custom_call.1} parent=1 // pred_check_branch
      %47 = sbr.rel (0) target = $region17
    $region16: #{tpu_custom_call.1} parent=1 // pred_region
      %s49 = ssub.s32 16384, 16384
      %50 = vsyncadd [#allocation9], %s49
      %s51 = sshll.u32 [#allocation8], 4
      %s52 = int_to_ptr.vmem [resolvable:$true] %s51
      %57 = dma.hbm_to_vmem [thread:$0]  %s3, 16384, %s52, [#allocation9], 64, 64, 4
    $region17: #{tpu_custom_call.1} parent=1 // pred_fallthru
      _
    // Predicated region
    $region18: #{tpu_custom_call.1} parent=1 // pred_check
      _
    $region19: #{tpu_custom_call.1} parent=1 // pred_check_branch
      %59 = sbr.rel (0) target = $region21
    $region20: #{tpu_custom_call.1} parent=1 // pred_region
      _
    $region21: #{tpu_custom_call.1} parent=1 // pred_fallthru
      _
    // Predicated region
    $region22: #{tpu_custom_call.1} parent=1 // pred_check
      _
    $region23: #{tpu_custom_call.1} parent=1 // pred_check_branch
      %61 = sbr.rel (0) target = $region25
    $region24: #{tpu_custom_call.1} parent=1 // pred_region
      %62 = dma.done [#allocation3], 1024
    $region25: #{tpu_custom_call.1} parent=1 // pred_fallthru
      _
    // Predicated region
    $region26: #{tpu_custom_call.1} parent=1 // pred_check
      _
    $region27: #{tpu_custom_call.1} parent=1 // pred_check_branch
      %64 = sbr.rel (0) target = $region29
    $region28: #{tpu_custom_call.1} parent=1 // pred_region
      %65 = dma.done [#allocation6], 512
    $region29: #{tpu_custom_call.1} parent=1 // pred_fallthru
      _
    // Predicated region
    $region30: #{tpu_custom_call.1} parent=1 // pred_check
      _
    $region31: #{tpu_custom_call.1} parent=1 // pred_check_branch
      %67 = sbr.rel (0) target = $region33
    $region32: #{tpu_custom_call.1} parent=1 // pred_region
      %68 = dma.done [#allocation6], 256
    $region33: #{tpu_custom_call.1} parent=1 // pred_fallthru
      _
    // Predicated region
    $region34: #{tpu_custom_call.1} parent=1 // pred_check
      _
    $region35: #{tpu_custom_call.1} parent=1 // pred_check_branch
      %70 = sbr.rel (0) target = $region37
    $region36: #{tpu_custom_call.1} parent=1 // pred_region
      %71 = dma.done [#allocation9], 16384
    $region37: #{tpu_custom_call.1} parent=1 // pred_fallthru
      _
    %v73 = vld [vmem:[#allocation2] sm:$0xff]
    %v74 = vld [vmem:[#allocation2 + $0x8] sm:$0xff]
    %v75 = vld [vmem:[#allocation2 + $0x10] sm:$0xff]
    %v76 = vld [vmem:[#allocation2 + $0x18] sm:$0xff]
    %v77 = vld [vmem:[#allocation2 + $0x20] sm:$0xff]
    %v78 = vld [vmem:[#allocation2 + $0x28] sm:$0xff]
    %v79 = vld [vmem:[#allocation2 + $0x30] sm:$0xff]
    %v80 = vld [vmem:[#allocation2 + $0x38] sm:$0xff]
    %v89 = vcombine.high %v73, %v73
    %v90 = vcombine.high %v74, %v74
    %v91 = vcombine.high %v75, %v75
    %v92 = vcombine.high %v76, %v76
    %v93 = vcombine.high %v77, %v77
    %v94 = vcombine.high %v78, %v78
    %v95 = vcombine.high %v79, %v79
    %v96 = vcombine.high %v80, %v80
    %vm105 = vcmask 1043456
    %v106 = vsel %vm105, %v73, 0.0
    %v107 = vsel %vm105, %v89, 0.0
    %v108 = vadd.f32 %v106, %v107
    %109 = vadd.xlane.f32.xlu0 %v108
    %v110 = vpop.xlane.xlu0 %109
    %v111 = vsel %vm105, %v74, 0.0
    %v112 = vsel %vm105, %v90, 0.0
    %v113 = vadd.f32 %v111, %v112
    %114 = vadd.xlane.f32.xlu0 %v113
    %v115 = vpop.xlane.xlu0 %114
    %v116 = vsel %vm105, %v75, 0.0
    %v117 = vsel %vm105, %v91, 0.0
    %v118 = vadd.f32 %v116, %v117
    %119 = vadd.xlane.f32.xlu0 %v118
    %v120 = vpop.xlane.xlu0 %119
    %v121 = vsel %vm105, %v76, 0.0
    %v122 = vsel %vm105, %v92, 0.0
    %v123 = vadd.f32 %v121, %v122
    %124 = vadd.xlane.f32.xlu0 %v123
    %v125 = vpop.xlane.xlu0 %124
    %v126 = vsel %vm105, %v77, 0.0
    %v127 = vsel %vm105, %v93, 0.0
    %v128 = vadd.f32 %v126, %v127
    %129 = vadd.xlane.f32.xlu0 %v128
    %v130 = vpop.xlane.xlu0 %129
    %v131 = vsel %vm105, %v78, 0.0
    %v132 = vsel %vm105, %v94, 0.0
    %v133 = vadd.f32 %v131, %v132
    %134 = vadd.xlane.f32.xlu0 %v133
    %v135 = vpop.xlane.xlu0 %134
    %v136 = vsel %vm105, %v79, 0.0
    %v137 = vsel %vm105, %v95, 0.0
    %v138 = vadd.f32 %v136, %v137
    %139 = vadd.xlane.f32.xlu0 %v138
    %v140 = vpop.xlane.xlu0 %139
    %v141 = vsel %vm105, %v80, 0.0
    %v142 = vsel %vm105, %v96, 0.0
    %v143 = vadd.f32 %v141, %v142
    %144 = vadd.xlane.f32.xlu0 %v143
    %v145 = vpop.xlane.xlu0 %144
    %v146 = vrcp.pop 256.0
    %v147 = vmul.f32 %v110, %v146
    %v148 = vmul.f32 %v115, %v146
    %v149 = vmul.f32 %v120, %v146
    %v150 = vmul.f32 %v125, %v146
    %v151 = vmul.f32 %v130, %v146
    %v152 = vmul.f32 %v135, %v146
    %v153 = vmul.f32 %v140, %v146
    %v154 = vmul.f32 %v145, %v146
    %v155 = vpack.c.bf16 %v147, %v147
    %v156 = vpack.c.bf16 %v148, %v148
    %v157 = vpack.c.bf16 %v149, %v149
    %v158 = vpack.c.bf16 %v150, %v150
    %v159 = vpack.c.bf16 %v151, %v151
    %v160 = vpack.c.bf16 %v152, %v152
    %v161 = vpack.c.bf16 %v153, %v153
    %v162 = vpack.c.bf16 %v154, %v154
    %v163 = vld [vmem:[#allocation5] sm:$0xff]
    %v164 = vld [vmem:[#allocation5 + $0x8] sm:$0xff]
    %v165 = vld [vmem:[#allocation5 + $0x10] sm:$0xff]
    %v166 = vld [vmem:[#allocation5 + $0x18] sm:$0xff]
    %v167 = vld [vmem:[#allocation7] sm:$0xff]
    %v168 = vld [vmem:[#allocation7 + $0x8] sm:$0xff]
    %v171 = vlaneseq
    %v172 = vshrl.u32 %v171, 7
    %v173 = vsub.s32 0, %v172
    %v174 = vrot.slane %v167, %v173
    %v175 = vlaneseq
    %v176 = vshrl.u32 %v175, 7
    %v177 = vsub.s32 1, %v176
    %v178 = vrot.slane %v167, %v177
    %v179 = vlaneseq
    %v180 = vshrl.u32 %v179, 7
    %v181 = vsub.s32 2, %v180
    %v182 = vrot.slane %v167, %v181
    %v183 = vlaneseq
    %v184 = vshrl.u32 %v183, 7
    %v185 = vsub.s32 3, %v184
    %v186 = vrot.slane %v167, %v185
    %v187 = vlaneseq
    %v188 = vshrl.u32 %v187, 7
    %v189 = vsub.s32 4, %v188
    %v190 = vrot.slane %v167, %v189
    %v191 = vlaneseq
    %v192 = vshrl.u32 %v191, 7
    %v193 = vsub.s32 5, %v192
    %v194 = vrot.slane %v167, %v193
    %v195 = vlaneseq
    %v196 = vshrl.u32 %v195, 7
    %v197 = vsub.s32 6, %v196
    %v198 = vrot.slane %v167, %v197
    %v199 = vlaneseq
    %v200 = vshrl.u32 %v199, 7
    %v201 = vsub.s32 7, %v200
    %v202 = vrot.slane %v167, %v201
    %v203 = vlaneseq
    %v204 = vshrl.u32 %v203, 7
    %v205 = vsub.s32 0, %v204
    %v206 = vrot.slane %v168, %v205
    %v207 = vlaneseq
    %v208 = vshrl.u32 %v207, 7
    %v209 = vsub.s32 1, %v208
    %v210 = vrot.slane %v168, %v209
    %v211 = vlaneseq
    %v212 = vshrl.u32 %v211, 7
    %v213 = vsub.s32 2, %v212
    %v214 = vrot.slane %v168, %v213
    %v215 = vlaneseq
    %v216 = vshrl.u32 %v215, 7
    %v217 = vsub.s32 3, %v216
    %v218 = vrot.slane %v168, %v217
    %v219 = vlaneseq
    %v220 = vshrl.u32 %v219, 7
    %v221 = vsub.s32 4, %v220
    %v222 = vrot.slane %v168, %v221
    %v223 = vlaneseq
    %v224 = vshrl.u32 %v223, 7
    %v225 = vsub.s32 5, %v224
    %v226 = vrot.slane %v168, %v225
    %v227 = vlaneseq
    %v228 = vshrl.u32 %v227, 7
    %v229 = vsub.s32 6, %v228
    %v230 = vrot.slane %v168, %v229
    %v231 = vlaneseq
    %v232 = vshrl.u32 %v231, 7
    %v233 = vsub.s32 7, %v232
    %v234 = vrot.slane %v168, %v233
    %v259 = vunpack.c.l.b16 %v155
    %v260 = vunpack.c.l.b16 %v156
    %v261 = vunpack.c.l.b16 %v157
    %v262 = vunpack.c.l.b16 %v158
    %v263 = vunpack.c.l.b16 %v159
    %v264 = vunpack.c.l.b16 %v160
    %v265 = vunpack.c.l.b16 %v161
    %v266 = vunpack.c.l.b16 %v162
    %v267 = vlaneseq
    %v268 = vand.u32 %v267, 127
    %v269 = vlaneseq
    %v270 = vshrl.u32 %v269, 7
    %v271 = vsub.s32 %v268, %v270
    %v272 = vrot.slane %v259, %v271
    %v273 = vlaneseq
    %v274 = vshrl.u32 %v273, 7
    %v275 = vsub.s32 %v268, %v274
    %v276 = vrot.slane %v260, %v275
    %v277 = vlaneseq
    %v278 = vshrl.u32 %v277, 7
    %v279 = vsub.s32 %v268, %v278
    %v280 = vrot.slane %v261, %v279
    %v281 = vlaneseq
    %v282 = vshrl.u32 %v281, 7
    %v283 = vsub.s32 %v268, %v282
    %v284 = vrot.slane %v262, %v283
    %v285 = vlaneseq
    %v286 = vshrl.u32 %v285, 7
    %v287 = vsub.s32 %v268, %v286
    %v288 = vrot.slane %v263, %v287
    %v289 = vlaneseq
    %v290 = vshrl.u32 %v289, 7
    %v291 = vsub.s32 %v268, %v290
    %v292 = vrot.slane %v264, %v291
    %v293 = vlaneseq
    %v294 = vshrl.u32 %v293, 7
    %v295 = vsub.s32 %v268, %v294
    %v296 = vrot.slane %v265, %v295
    %v297 = vlaneseq
    %v298 = vshrl.u32 %v297, 7
    %v299 = vsub.s32 %v268, %v298
    %v300 = vrot.slane %v266, %v299
    %vm301 = vcmask 1041409
    %v302 = vsel %vm301, %v276, %v272
    %vm303 = vcmask 1042434
    %v304 = vsel %vm303, %v280, %v302
    %vm305 = vcmask 1043459
    %v306 = vsel %vm305, %v284, %v304
    %vm307 = vcmask 1044484
    %v308 = vsel %vm307, %v288, %v306
    %vm309 = vcmask 1045509
    %v310 = vsel %vm309, %v292, %v308
    %vm311 = vcmask 1046534
    %v312 = vsel %vm311, %v296, %v310
    %vm313 = vcmask 1047559
    %v314 = vsel %vm313, %v300, %v312
    %v315 = vpack.c.b16 %v314, %v314
    %v320 = vcombine.high %v163, %v163
    %v322 = vunpack.c.l.s4 1983009808
    %v323 = vunpack.c.0.s8 %v322
    %v324 = vlaneseq
    %v325 = vshrl.u32 %v324, 7
    %v326 = vsub.s32 %v323, %v325
    %v327 = vrot.slane %v163, %v326
    %v329 = vunpack.c.l.s4 1983009808
    %v330 = vunpack.c.0.s8 %v329
    %v331 = vlaneseq
    %v332 = vshrl.u32 %v331, 7
    %v333 = vsub.s32 %v330, %v332
    %v334 = vrot.slane %v320, %v333
    %v335 = vcombine.high %v327, %v327
    %v336 = vcombine.high %v334, %v334
    %v337 = vcombine.high %v164, %v164
    %v339 = vunpack.c.l.s4 1983009808
    %v340 = vunpack.c.0.s8 %v339
    %v341 = vlaneseq
    %v342 = vshrl.u32 %v341, 7
    %v343 = vsub.s32 %v340, %v342
    %v344 = vrot.slane %v164, %v343
    %v346 = vunpack.c.l.s4 1983009808
    %v347 = vunpack.c.0.s8 %v346
    %v348 = vlaneseq
    %v349 = vshrl.u32 %v348, 7
    %v350 = vsub.s32 %v347, %v349
    %v351 = vrot.slane %v337, %v350
    %v352 = vcombine.high %v344, %v344
    %v353 = vcombine.high %v351, %v351
    %v354 = vcombine.high %v165, %v165
    %v356 = vunpack.c.l.s4 1983009808
    %v357 = vunpack.c.0.s8 %v356
    %v358 = vlaneseq
    %v359 = vshrl.u32 %v358, 7
    %v360 = vsub.s32 %v357, %v359
    %v361 = vrot.slane %v165, %v360
    %v363 = vunpack.c.l.s4 1983009808
    %v364 = vunpack.c.0.s8 %v363
    %v365 = vlaneseq
    %v366 = vshrl.u32 %v365, 7
    %v367 = vsub.s32 %v364, %v366
    %v368 = vrot.slane %v354, %v367
    %v369 = vcombine.high %v361, %v361
    %v370 = vcombine.high %v368, %v368
    %v371 = vcombine.high %v166, %v166
    %v373 = vunpack.c.l.s4 1983009808
    %v374 = vunpack.c.0.s8 %v373
    %v375 = vlaneseq
    %v376 = vshrl.u32 %v375, 7
    %v377 = vsub.s32 %v374, %v376
    %v378 = vrot.slane %v166, %v377
    %v380 = vunpack.c.l.s4 1983009808
    %v381 = vunpack.c.0.s8 %v380
    %v382 = vlaneseq
    %v383 = vshrl.u32 %v382, 7
    %v384 = vsub.s32 %v381, %v383
    %v385 = vrot.slane %v371, %v384
    %v386 = vcombine.high %v378, %v378
    %v387 = vcombine.high %v385, %v385
    %vm388 = vcmask 31744
    %v390 = vsel %vm388, %v315, 0
    %vm392 = vcmask 1041408
    %v394 = vsel %vm392, %v327, 0
    %v397 = vsel %vm392, %v335, 0
    %v400 = vsel %vm392, %v334, 0
    %v403 = vsel %vm392, %v336, 0
    %v406 = vsel %vm392, %v344, 0
    %v409 = vsel %vm392, %v352, 0
    %v412 = vsel %vm392, %v351, 0
    %v415 = vsel %vm392, %v353, 0
    %v418 = vsel %vm392, %v361, 0
    %v421 = vsel %vm392, %v369, 0
    %v424 = vsel %vm392, %v368, 0
    %v427 = vsel %vm392, %v370, 0
    %v430 = vsel %vm392, %v378, 0
    %v433 = vsel %vm392, %v386, 0
    %v436 = vsel %vm392, %v385, 0
    %v439 = vsel %vm392, %v387, 0
    %441 = vmatprep.subr.bf16.mxu0 %v397
    %442 = vmatpush1.bf16.msra.mxu0 %v394
    %443 = vmatprep.subr.bf16.mxu0 0
    %444 = vmatpush1.bf16.msra.mxu0 0
    %445 = vmatprep.subr.bf16.mxu0 0
    %446 = vmatpush1.bf16.msra.mxu0 0
    %447 = vmatprep.subr.bf16.mxu0 0
    %448 = vmatpush1.bf16.msra.mxu0 0
    %449 = vmatprep.subr.bf16.mxu0 0
    %450 = vmatpush1.bf16.msra.mxu0 0
    %451 = vmatprep.subr.bf16.mxu0 0
    %452 = vmatpush1.bf16.msra.mxu0 0
    %453 = vmatprep.subr.bf16.mxu0 0
    %454 = vmatpush1.bf16.msra.mxu0 0
    %455 = vmatprep.subr.bf16.mxu0 0
    %456 = vmatpush1.bf16.msra.mxu0 0
    %457 = vmatprep.subr.bf16.mxu0 0
    %458 = vmatpush1.bf16.msra.mxu0 0
    %459 = vmatprep.subr.bf16.mxu0 0
    %460 = vmatpush1.bf16.msra.mxu0 0
    %461 = vmatprep.subr.bf16.mxu0 0
    %462 = vmatpush1.bf16.msra.mxu0 0
    %463 = vmatprep.subr.bf16.mxu0 0
    %464 = vmatpush1.bf16.msra.mxu0 0
    %465 = vmatprep.subr.bf16.mxu0 0
    %466 = vmatpush1.bf16.msra.mxu0 0
    %467 = vmatprep.subr.bf16.mxu0 0
    %468 = vmatpush1.bf16.msra.mxu0 0
    %469 = vmatprep.subr.bf16.mxu0 0
    %470 = vmatpush1.bf16.msra.mxu0 0
    %471 = vmatprep.subr.bf16.mxu0 0
    %472 = vmatpush1.bf16.msra.mxu0 0
    %473 = vmatprep.mubr.bf16.mxu0 0
    %474 = vmatmul.mubr.bf16.gmra.mrb[0].mxu0 %v390
    %v475 = vpop.f32.mrb[0].mxu0
    %v476 = vadd.f32 %v174, %v475
    %v477 = vpop.f32.mrb[0].mxu0
    %v478 = vadd.f32 %v178, %v477
    %v479 = vpop.f32.mrb[0].mxu0
    %v480 = vpop.f32.mrb[0].mxu0
    %481 = vdwg.mxu0
    %482 = vmatprep.subr.bf16.mxu0 %v403
    %483 = vmatpush1.bf16.msra.mxu0 %v400
    %484 = vmatprep.subr.bf16.mxu0 0
    %485 = vmatpush1.bf16.msra.mxu0 0
    %486 = vmatprep.subr.bf16.mxu0 0
    %487 = vmatpush1.bf16.msra.mxu0 0
    %488 = vmatprep.subr.bf16.mxu0 0
    %489 = vmatpush1.bf16.msra.mxu0 0
    %490 = vmatprep.subr.bf16.mxu0 0
    %491 = vmatpush1.bf16.msra.mxu0 0
    %492 = vmatprep.subr.bf16.mxu0 0
    %493 = vmatpush1.bf16.msra.mxu0 0
    %494 = vmatprep.subr.bf16.mxu0 0
    %495 = vmatpush1.bf16.msra.mxu0 0
    %496 = vmatprep.subr.bf16.mxu0 0
    %497 = vmatpush1.bf16.msra.mxu0 0
    %498 = vmatprep.subr.bf16.mxu0 0
    %499 = vmatpush1.bf16.msra.mxu0 0
    %500 = vmatprep.subr.bf16.mxu0 0
    %501 = vmatpush1.bf16.msra.mxu0 0
    %502 = vmatprep.subr.bf16.mxu0 0
    %503 = vmatpush1.bf16.msra.mxu0 0
    %504 = vmatprep.subr.bf16.mxu0 0
    %505 = vmatpush1.bf16.msra.mxu0 0
    %506 = vmatprep.subr.bf16.mxu0 0
    %507 = vmatpush1.bf16.msra.mxu0 0
    %508 = vmatprep.subr.bf16.mxu0 0
    %509 = vmatpush1.bf16.msra.mxu0 0
    %510 = vmatprep.subr.bf16.mxu0 0
    %511 = vmatpush1.bf16.msra.mxu0 0
    %512 = vmatprep.subr.bf16.mxu0 0
    %513 = vmatpush1.bf16.msra.mxu0 0
    %514 = vmatprep.mubr.bf16.mxu0 0
    %515 = vmatmul.mubr.bf16.gmra.mrb[0].mxu0 %v390
    %v516 = vpop.f32.mrb[0].mxu0
    %v517 = vadd.f32 %v182, %v516
    %v518 = vpop.f32.mrb[0].mxu0
    %v519 = vadd.f32 %v186, %v518
    %v520 = vpop.f32.mrb[0].mxu0
    %v521 = vpop.f32.mrb[0].mxu0
    %522 = vdwg.mxu0
    %523 = vmatprep.subr.bf16.mxu0 %v409
    %524 = vmatpush1.bf16.msra.mxu0 %v406
    %525 = vmatprep.subr.bf16.mxu0 0
    %526 = vmatpush1.bf16.msra.mxu0 0
    %527 = vmatprep.subr.bf16.mxu0 0
    %528 = vmatpush1.bf16.msra.mxu0 0
    %529 = vmatprep.subr.bf16.mxu0 0
    %530 = vmatpush1.bf16.msra.mxu0 0
    %531 = vmatprep.subr.bf16.mxu0 0
    %532 = vmatpush1.bf16.msra.mxu0 0
    %533 = vmatprep.subr.bf16.mxu0 0
    %534 = vmatpush1.bf16.msra.mxu0 0
    %535 = vmatprep.subr.bf16.mxu0 0
    %536 = vmatpush1.bf16.msra.mxu0 0
    %537 = vmatprep.subr.bf16.mxu0 0
    %538 = vmatpush1.bf16.msra.mxu0 0
    %539 = vmatprep.subr.bf16.mxu0 0
    %540 = vmatpush1.bf16.msra.mxu0 0
    %541 = vmatprep.subr.bf16.mxu0 0
    %542 = vmatpush1.bf16.msra.mxu0 0
    %543 = vmatprep.subr.bf16.mxu0 0
    %544 = vmatpush1.bf16.msra.mxu0 0
    %545 = vmatprep.subr.bf16.mxu0 0
    %546 = vmatpush1.bf16.msra.mxu0 0
    %547 = vmatprep.subr.bf16.mxu0 0
    %548 = vmatpush1.bf16.msra.mxu0 0
    %549 = vmatprep.subr.bf16.mxu0 0
    %550 = vmatpush1.bf16.msra.mxu0 0
    %551 = vmatprep.subr.bf16.mxu0 0
    %552 = vmatpush1.bf16.msra.mxu0 0
    %553 = vmatprep.subr.bf16.mxu0 0
    %554 = vmatpush1.bf16.msra.mxu0 0
    %555 = vmatprep.mubr.bf16.mxu0 0
    %556 = vmatmul.mubr.bf16.gmra.mrb[0].mxu0 %v390
    %v557 = vpop.f32.mrb[0].mxu0
    %v558 = vadd.f32 %v190, %v557
    %v559 = vpop.f32.mrb[0].mxu0
    %v560 = vadd.f32 %v194, %v559
    %v561 = vpop.f32.mrb[0].mxu0
    %v562 = vpop.f32.mrb[0].mxu0
    %563 = vdwg.mxu0
    %564 = vmatprep.subr.bf16.mxu0 %v415
    %565 = vmatpush1.bf16.msra.mxu0 %v412
    %566 = vmatprep.subr.bf16.mxu0 0
    %567 = vmatpush1.bf16.msra.mxu0 0
    %568 = vmatprep.subr.bf16.mxu0 0
    %569 = vmatpush1.bf16.msra.mxu0 0
    %570 = vmatprep.subr.bf16.mxu0 0
    %571 = vmatpush1.bf16.msra.mxu0 0
    %572 = vmatprep.subr.bf16.mxu0 0
    %573 = vmatpush1.bf16.msra.mxu0 0
    %574 = vmatprep.subr.bf16.mxu0 0
    %575 = vmatpush1.bf16.msra.mxu0 0
    %576 = vmatprep.subr.bf16.mxu0 0
    %577 = vmatpush1.bf16.msra.mxu0 0
    %578 = vmatprep.subr.bf16.mxu0 0
    %579 = vmatpush1.bf16.msra.mxu0 0
    %580 = vmatprep.subr.bf16.mxu0 0
    %581 = vmatpush1.bf16.msra.mxu0 0
    %582 = vmatprep.subr.bf16.mxu0 0
    %583 = vmatpush1.bf16.msra.mxu0 0
    %584 = vmatprep.subr.bf16.mxu0 0
    %585 = vmatpush1.bf16.msra.mxu0 0
    %586 = vmatprep.subr.bf16.mxu0 0
    %587 = vmatpush1.bf16.msra.mxu0 0
    %588 = vmatprep.subr.bf16.mxu0 0
    %589 = vmatpush1.bf16.msra.mxu0 0
    %590 = vmatprep.subr.bf16.mxu0 0
    %591 = vmatpush1.bf16.msra.mxu0 0
    %592 = vmatprep.subr.bf16.mxu0 0
    %593 = vmatpush1.bf16.msra.mxu0 0
    %594 = vmatprep.subr.bf16.mxu0 0
    %595 = vmatpush1.bf16.msra.mxu0 0
    %596 = vmatprep.mubr.bf16.mxu0 0
    %597 = vmatmul.mubr.bf16.gmra.mrb[0].mxu0 %v390
    %v598 = vpop.f32.mrb[0].mxu0
    %v599 = vadd.f32 %v198, %v598
    %v600 = vpop.f32.mrb[0].mxu0
    %v601 = vadd.f32 %v202, %v600
    %v602 = vpop.f32.mrb[0].mxu0
    %v603 = vpop.f32.mrb[0].mxu0
    %604 = vdwg.mxu0
    %605 = vmatprep.subr.bf16.mxu0 %v421
    %606 = vmatpush1.bf16.msra.mxu0 %v418
    %607 = vmatprep.subr.bf16.mxu0 0
    %608 = vmatpush1.bf16.msra.mxu0 0
    %609 = vmatprep.subr.bf16.mxu0 0
    %610 = vmatpush1.bf16.msra.mxu0 0
    %611 = vmatprep.subr.bf16.mxu0 0
    %612 = vmatpush1.bf16.msra.mxu0 0
    %613 = vmatprep.subr.bf16.mxu0 0
    %614 = vmatpush1.bf16.msra.mxu0 0
    %615 = vmatprep.subr.bf16.mxu0 0
    %616 = vmatpush1.bf16.msra.mxu0 0
    %617 = vmatprep.subr.bf16.mxu0 0
    %618 = vmatpush1.bf16.msra.mxu0 0
    %619 = vmatprep.subr.bf16.mxu0 0
    %620 = vmatpush1.bf16.msra.mxu0 0
    %621 = vmatprep.subr.bf16.mxu0 0
    %622 = vmatpush1.bf16.msra.mxu0 0
    %623 = vmatprep.subr.bf16.mxu0 0
    %624 = vmatpush1.bf16.msra.mxu0 0
    %625 = vmatprep.subr.bf16.mxu0 0
    %626 = vmatpush1.bf16.msra.mxu0 0
    %627 = vmatprep.subr.bf16.mxu0 0
    %628 = vmatpush1.bf16.msra.mxu0 0
    %629 = vmatprep.subr.bf16.mxu0 0
    %630 = vmatpush1.bf16.msra.mxu0 0
    %631 = vmatprep.subr.bf16.mxu0 0
    %632 = vmatpush1.bf16.msra.mxu0 0
    %633 = vmatprep.subr.bf16.mxu0 0
    %634 = vmatpush1.bf16.msra.mxu0 0
    %635 = vmatprep.subr.bf16.mxu0 0
    %636 = vmatpush1.bf16.msra.mxu0 0
    %637 = vmatprep.mubr.bf16.mxu0 0
    %638 = vmatmul.mubr.bf16.gmra.mrb[0].mxu0 %v390
    %v639 = vpop.f32.mrb[0].mxu0
    %v640 = vadd.f32 %v206, %v639
    %v641 = vpop.f32.mrb[0].mxu0
    %v642 = vadd.f32 %v210, %v641
    %v643 = vpop.f32.mrb[0].mxu0
    %v644 = vpop.f32.mrb[0].mxu0
    %645 = vdwg.mxu0
    %646 = vmatprep.subr.bf16.mxu0 %v427
    %647 = vmatpush1.bf16.msra.mxu0 %v424
    %648 = vmatprep.subr.bf16.mxu0 0
    %649 = vmatpush1.bf16.msra.mxu0 0
    %650 = vmatprep.subr.bf16.mxu0 0
    %651 = vmatpush1.bf16.msra.mxu0 0
    %652 = vmatprep.subr.bf16.mxu0 0
    %653 = vmatpush1.bf16.msra.mxu0 0
    %654 = vmatprep.subr.bf16.mxu0 0
    %655 = vmatpush1.bf16.msra.mxu0 0
    %656 = vmatprep.subr.bf16.mxu0 0
    %657 = vmatpush1.bf16.msra.mxu0 0
    %658 = vmatprep.subr.bf16.mxu0 0
    %659 = vmatpush1.bf16.msra.mxu0 0
    %660 = vmatprep.subr.bf16.mxu0 0
    %661 = vmatpush1.bf16.msra.mxu0 0
    %662 = vmatprep.subr.bf16.mxu0 0
    %663 = vmatpush1.bf16.msra.mxu0 0
    %664 = vmatprep.subr.bf16.mxu0 0
    %665 = vmatpush1.bf16.msra.mxu0 0
    %666 = vmatprep.subr.bf16.mxu0 0
    %667 = vmatpush1.bf16.msra.mxu0 0
    %668 = vmatprep.subr.bf16.mxu0 0
    %669 = vmatpush1.bf16.msra.mxu0 0
    %670 = vmatprep.subr.bf16.mxu0 0
    %671 = vmatpush1.bf16.msra.mxu0 0
    %672 = vmatprep.subr.bf16.mxu0 0
    %673 = vmatpush1.bf16.msra.mxu0 0
    %674 = vmatprep.subr.bf16.mxu0 0
    %675 = vmatpush1.bf16.msra.mxu0 0
    %676 = vmatprep.subr.bf16.mxu0 0
    %677 = vmatpush1.bf16.msra.mxu0 0
    %678 = vmatprep.mubr.bf16.mxu0 0
    %679 = vmatmul.mubr.bf16.gmra.mrb[0].mxu0 %v390
    %v680 = vpop.f32.mrb[0].mxu0
    %v681 = vadd.f32 %v214, %v680
    %v682 = vpop.f32.mrb[0].mxu0
    %v683 = vadd.f32 %v218, %v682
    %v684 = vpop.f32.mrb[0].mxu0
    %v685 = vpop.f32.mrb[0].mxu0
    %686 = vdwg.mxu0
    %687 = vmatprep.subr.bf16.mxu0 %v433
    %688 = vmatpush1.bf16.msra.mxu0 %v430
    %689 = vmatprep.subr.bf16.mxu0 0
    %690 = vmatpush1.bf16.msra.mxu0 0
    %691 = vmatprep.subr.bf16.mxu0 0
    %692 = vmatpush1.bf16.msra.mxu0 0
    %693 = vmatprep.subr.bf16.mxu0 0
    %694 = vmatpush1.bf16.msra.mxu0 0
    %695 = vmatprep.subr.bf16.mxu0 0
    %696 = vmatpush1.bf16.msra.mxu0 0
    %697 = vmatprep.subr.bf16.mxu0 0
    %698 = vmatpush1.bf16.msra.mxu0 0
    %699 = vmatprep.subr.bf16.mxu0 0
    %700 = vmatpush1.bf16.msra.mxu0 0
    %701 = vmatprep.subr.bf16.mxu0 0
    %702 = vmatpush1.bf16.msra.mxu0 0
    %703 = vmatprep.subr.bf16.mxu0 0
    %704 = vmatpush1.bf16.msra.mxu0 0
    %705 = vmatprep.subr.bf16.mxu0 0
    %706 = vmatpush1.bf16.msra.mxu0 0
    %707 = vmatprep.subr.bf16.mxu0 0
    %708 = vmatpush1.bf16.msra.mxu0 0
    %709 = vmatprep.subr.bf16.mxu0 0
    %710 = vmatpush1.bf16.msra.mxu0 0
    %711 = vmatprep.subr.bf16.mxu0 0
    %712 = vmatpush1.bf16.msra.mxu0 0
    %713 = vmatprep.subr.bf16.mxu0 0
    %714 = vmatpush1.bf16.msra.mxu0 0
    %715 = vmatprep.subr.bf16.mxu0 0
    %716 = vmatpush1.bf16.msra.mxu0 0
    %717 = vmatprep.subr.bf16.mxu0 0
    %718 = vmatpush1.bf16.msra.mxu0 0
    %719 = vmatprep.mubr.bf16.mxu0 0
    %720 = vmatmul.mubr.bf16.gmra.mrb[0].mxu0 %v390
    %v721 = vpop.f32.mrb[0].mxu0
    %v722 = vadd.f32 %v222, %v721
    %v723 = vpop.f32.mrb[0].mxu0
    %v724 = vadd.f32 %v226, %v723
    %v725 = vpop.f32.mrb[0].mxu0
    %v726 = vpop.f32.mrb[0].mxu0
    %727 = vdwg.mxu0
    %728 = vmatprep.subr.bf16.mxu0 %v439
    %729 = vmatpush1.bf16.msra.mxu0 %v436
    %730 = vmatprep.subr.bf16.mxu0 0
    %731 = vmatpush1.bf16.msra.mxu0 0
    %732 = vmatprep.subr.bf16.mxu0 0
    %733 = vmatpush1.bf16.msra.mxu0 0
    %734 = vmatprep.subr.bf16.mxu0 0
    %735 = vmatpush1.bf16.msra.mxu0 0
    %736 = vmatprep.subr.bf16.mxu0 0
    %737 = vmatpush1.bf16.msra.mxu0 0
    %738 = vmatprep.subr.bf16.mxu0 0
    %739 = vmatpush1.bf16.msra.mxu0 0
    %740 = vmatprep.subr.bf16.mxu0 0
    %741 = vmatpush1.bf16.msra.mxu0 0
    %742 = vmatprep.subr.bf16.mxu0 0
    %743 = vmatpush1.bf16.msra.mxu0 0
    %744 = vmatprep.subr.bf16.mxu0 0
    %745 = vmatpush1.bf16.msra.mxu0 0
    %746 = vmatprep.subr.bf16.mxu0 0
    %747 = vmatpush1.bf16.msra.mxu0 0
    %748 = vmatprep.subr.bf16.mxu0 0
    %749 = vmatpush1.bf16.msra.mxu0 0
    %750 = vmatprep.subr.bf16.mxu0 0
    %751 = vmatpush1.bf16.msra.mxu0 0
    %752 = vmatprep.subr.bf16.mxu0 0
    %753 = vmatpush1.bf16.msra.mxu0 0
    %754 = vmatprep.subr.bf16.mxu0 0
    %755 = vmatpush1.bf16.msra.mxu0 0
    %756 = vmatprep.subr.bf16.mxu0 0
    %757 = vmatpush1.bf16.msra.mxu0 0
    %758 = vmatprep.subr.bf16.mxu0 0
    %759 = vmatpush1.bf16.msra.mxu0 0
    %760 = vmatprep.mubr.bf16.mxu0 0
    %761 = vmatmul.mubr.bf16.gmra.mrb[0].mxu0 %v390
    %v762 = vpop.f32.mrb[0].mxu0
    %v763 = vadd.f32 %v230, %v762
    %v764 = vpop.f32.mrb[0].mxu0
    %v765 = vadd.f32 %v234, %v764
    %v766 = vpop.f32.mrb[0].mxu0
    %v767 = vpop.f32.mrb[0].mxu0
    %768 = vdwg.mxu0
    %v769 = vmax.f32 %v476, 0.0
    %v770 = vmax.f32 %v478, 0.0
    %v771 = vmax.f32 %v517, 0.0
    %v772 = vmax.f32 %v519, 0.0
    %v773 = vmax.f32 %v558, 0.0
    %v774 = vmax.f32 %v560, 0.0
    %v775 = vmax.f32 %v599, 0.0
    %v776 = vmax.f32 %v601, 0.0
    %v777 = vmax.f32 %v640, 0.0
    %v778 = vmax.f32 %v642, 0.0
    %v779 = vmax.f32 %v681, 0.0
    %v780 = vmax.f32 %v683, 0.0
    %v781 = vmax.f32 %v722, 0.0
    %v782 = vmax.f32 %v724, 0.0
    %v783 = vmax.f32 %v763, 0.0
    %v784 = vmax.f32 %v765, 0.0
    %v785 = vpack.c.bf16 %v769, %v769
    %v786 = vpack.c.bf16 %v770, %v770
    %v787 = vpack.c.bf16 %v771, %v771
    %v788 = vpack.c.bf16 %v772, %v772
    %v789 = vpack.c.bf16 %v773, %v773
    %v790 = vpack.c.bf16 %v774, %v774
    %v791 = vpack.c.bf16 %v775, %v775
    %v792 = vpack.c.bf16 %v776, %v776
    %v793 = vpack.c.bf16 %v777, %v777
    %v794 = vpack.c.bf16 %v778, %v778
    %v795 = vpack.c.bf16 %v779, %v779
    %v796 = vpack.c.bf16 %v780, %v780
    %v797 = vpack.c.bf16 %v781, %v781
    %v798 = vpack.c.bf16 %v782, %v782
    %v799 = vpack.c.bf16 %v783, %v783
    %v800 = vpack.c.bf16 %v784, %v784
    %v801 = vld [vmem:[#allocation8] sm:$0xf]
    %v802 = vld [vmem:[#allocation8 + $0x4] sm:$0xf]
    %v803 = vld [vmem:[#allocation8 + $0x8] sm:$0xf]
    %v804 = vld [vmem:[#allocation8 + $0xc] sm:$0xf]
    %v805 = vld [vmem:[#allocation8 + $0x10] sm:$0xf]
    %v806 = vld [vmem:[#allocation8 + $0x14] sm:$0xf]
    %v807 = vld [vmem:[#allocation8 + $0x18] sm:$0xf]
    %v808 = vld [vmem:[#allocation8 + $0x1c] sm:$0xf]
    %v809 = vld [vmem:[#allocation8 + $0x20] sm:$0xf]
    %v810 = vld [vmem:[#allocation8 + $0x24] sm:$0xf]
    %v811 = vld [vmem:[#allocation8 + $0x28] sm:$0xf]
    %v812 = vld [vmem:[#allocation8 + $0x2c] sm:$0xf]
    %v813 = vld [vmem:[#allocation8 + $0x30] sm:$0xf]
    %v814 = vld [vmem:[#allocation8 + $0x34] sm:$0xf]
    %v815 = vld [vmem:[#allocation8 + $0x38] sm:$0xf]
    %v816 = vld [vmem:[#allocation8 + $0x3c] sm:$0xf]
    %v817 = vld [vmem:[#allocation8 + $0x40] sm:$0xf]
    %v818 = vld [vmem:[#allocation8 + $0x44] sm:$0xf]
    %v819 = vld [vmem:[#allocation8 + $0x48] sm:$0xf]
    %v820 = vld [vmem:[#allocation8 + $0x4c] sm:$0xf]
    %v821 = vld [vmem:[#allocation8 + $0x50] sm:$0xf]
    %v822 = vld [vmem:[#allocation8 + $0x54] sm:$0xf]
    %v823 = vld [vmem:[#allocation8 + $0x58] sm:$0xf]
    %v824 = vld [vmem:[#allocation8 + $0x5c] sm:$0xf]
    %v825 = vld [vmem:[#allocation8 + $0x60] sm:$0xf]
    %v826 = vld [vmem:[#allocation8 + $0x64] sm:$0xf]
    %v827 = vld [vmem:[#allocation8 + $0x68] sm:$0xf]
    %v828 = vld [vmem:[#allocation8 + $0x6c] sm:$0xf]
    %v829 = vld [vmem:[#allocation8 + $0x70] sm:$0xf]
    %v830 = vld [vmem:[#allocation8 + $0x74] sm:$0xf]
    %v831 = vld [vmem:[#allocation8 + $0x78] sm:$0xf]
    %v832 = vld [vmem:[#allocation8 + $0x7c] sm:$0xf]
    %v833 = vld [vmem:[#allocation8 + $0x80] sm:$0xf]
    %v834 = vld [vmem:[#allocation8 + $0x84] sm:$0xf]
    %v835 = vld [vmem:[#allocation8 + $0x88] sm:$0xf]
    %v836 = vld [vmem:[#allocation8 + $0x8c] sm:$0xf]
    %v837 = vld [vmem:[#allocation8 + $0x90] sm:$0xf]
    %v838 = vld [vmem:[#allocation8 + $0x94] sm:$0xf]
    %v839 = vld [vmem:[#allocation8 + $0x98] sm:$0xf]
    %v840 = vld [vmem:[#allocation8 + $0x9c] sm:$0xf]
    %v841 = vld [vmem:[#allocation8 + $0xa0] sm:$0xf]
    %v842 = vld [vmem:[#allocation8 + $0xa4] sm:$0xf]
    %v843 = vld [vmem:[#allocation8 + $0xa8] sm:$0xf]
    %v844 = vld [vmem:[#allocation8 + $0xac] sm:$0xf]
    %v845 = vld [vmem:[#allocation8 + $0xb0] sm:$0xf]
    %v846 = vld [vmem:[#allocation8 + $0xb4] sm:$0xf]
    %v847 = vld [vmem:[#allocation8 + $0xb8] sm:$0xf]
    %v848 = vld [vmem:[#allocation8 + $0xbc] sm:$0xf]
    %v849 = vld [vmem:[#allocation8 + $0xc0] sm:$0xf]
    %v850 = vld [vmem:[#allocation8 + $0xc4] sm:$0xf]
    %v851 = vld [vmem:[#allocation8 + $0xc8] sm:$0xf]
    %v852 = vld [vmem:[#allocation8 + $0xcc] sm:$0xf]
    %v853 = vld [vmem:[#allocation8 + $0xd0] sm:$0xf]
    %v854 = vld [vmem:[#allocation8 + $0xd4] sm:$0xf]
    %v855 = vld [vmem:[#allocation8 + $0xd8] sm:$0xf]
    %v856 = vld [vmem:[#allocation8 + $0xdc] sm:$0xf]
    %v857 = vld [vmem:[#allocation8 + $0xe0] sm:$0xf]
    %v858 = vld [vmem:[#allocation8 + $0xe4] sm:$0xf]
    %v859 = vld [vmem:[#allocation8 + $0xe8] sm:$0xf]
    %v860 = vld [vmem:[#allocation8 + $0xec] sm:$0xf]
    %v861 = vld [vmem:[#allocation8 + $0xf0] sm:$0xf]
    %v862 = vld [vmem:[#allocation8 + $0xf4] sm:$0xf]
    %v863 = vld [vmem:[#allocation8 + $0xf8] sm:$0xf]
    %v864 = vld [vmem:[#allocation8 + $0xfc] sm:$0xf]
    %v865 = vld [vmem:[#allocation8 + $0x100] sm:$0xf]
    %v866 = vld [vmem:[#allocation8 + $0x104] sm:$0xf]
    %v867 = vld [vmem:[#allocation8 + $0x108] sm:$0xf]
    %v868 = vld [vmem:[#allocation8 + $0x10c] sm:$0xf]
    %v869 = vld [vmem:[#allocation8 + $0x110] sm:$0xf]
    %v870 = vld [vmem:[#allocation8 + $0x114] sm:$0xf]
    %v871 = vld [vmem:[#allocation8 + $0x118] sm:$0xf]
    %v872 = vld [vmem:[#allocation8 + $0x11c] sm:$0xf]
    %v873 = vld [vmem:[#allocation8 + $0x120] sm:$0xf]
    %v874 = vld [vmem:[#allocation8 + $0x124] sm:$0xf]
    %v875 = vld [vmem:[#allocation8 + $0x128] sm:$0xf]
    %v876 = vld [vmem:[#allocation8 + $0x12c] sm:$0xf]
    %v877 = vld [vmem:[#allocation8 + $0x130] sm:$0xf]
    %v878 = vld [vmem:[#allocation8 + $0x134] sm:$0xf]
    %v879 = vld [vmem:[#allocation8 + $0x138] sm:$0xf]
    %v880 = vld [vmem:[#allocation8 + $0x13c] sm:$0xf]
    %v881 = vld [vmem:[#allocation8 + $0x140] sm:$0xf]
    %v882 = vld [vmem:[#allocation8 + $0x144] sm:$0xf]
    %v883 = vld [vmem:[#allocation8 + $0x148] sm:$0xf]
    %v884 = vld [vmem:[#allocation8 + $0x14c] sm:$0xf]
    %v885 = vld [vmem:[#allocation8 + $0x150] sm:$0xf]
    %v886 = vld [vmem:[#allocation8 + $0x154] sm:$0xf]
    %v887 = vld [vmem:[#allocation8 + $0x158] sm:$0xf]
    %v888 = vld [vmem:[#allocation8 + $0x15c] sm:$0xf]
    %v889 = vld [vmem:[#allocation8 + $0x160] sm:$0xf]
    %v890 = vld [vmem:[#allocation8 + $0x164] sm:$0xf]
    %v891 = vld [vmem:[#allocation8 + $0x168] sm:$0xf]
    %v892 = vld [vmem:[#allocation8 + $0x16c] sm:$0xf]
    %v893 = vld [vmem:[#allocation8 + $0x170] sm:$0xf]
    %v894 = vld [vmem:[#allocation8 + $0x174] sm:$0xf]
    %v895 = vld [vmem:[#allocation8 + $0x178] sm:$0xf]
    %v896 = vld [vmem:[#allocation8 + $0x17c] sm:$0xf]
    %v897 = vld [vmem:[#allocation8 + $0x180] sm:$0xf]
    %v898 = vld [vmem:[#allocation8 + $0x184] sm:$0xf]
    %v899 = vld [vmem:[#allocation8 + $0x188] sm:$0xf]
    %v900 = vld [vmem:[#allocation8 + $0x18c] sm:$0xf]
    %v901 = vld [vmem:[#allocation8 + $0x190] sm:$0xf]
    %v902 = vld [vmem:[#allocation8 + $0x194] sm:$0xf]
    %v903 = vld [vmem:[#allocation8 + $0x198] sm:$0xf]
    %v904 = vld [vmem:[#allocation8 + $0x19c] sm:$0xf]
    %v905 = vld [vmem:[#allocation8 + $0x1a0] sm:$0xf]
    %v906 = vld [vmem:[#allocation8 + $0x1a4] sm:$0xf]
    %v907 = vld [vmem:[#allocation8 + $0x1a8] sm:$0xf]
    %v908 = vld [vmem:[#allocation8 + $0x1ac] sm:$0xf]
    %v909 = vld [vmem:[#allocation8 + $0x1b0] sm:$0xf]
    %v910 = vld [vmem:[#allocation8 + $0x1b4] sm:$0xf]
    %v911 = vld [vmem:[#allocation8 + $0x1b8] sm:$0xf]
    %v912 = vld [vmem:[#allocation8 + $0x1bc] sm:$0xf]
    %v913 = vld [vmem:[#allocation8 + $0x1c0] sm:$0xf]
    %v914 = vld [vmem:[#allocation8 + $0x1c4] sm:$0xf]
    %v915 = vld [vmem:[#allocation8 + $0x1c8] sm:$0xf]
    %v916 = vld [vmem:[#allocation8 + $0x1cc] sm:$0xf]
    %v917 = vld [vmem:[#allocation8 + $0x1d0] sm:$0xf]
    %v918 = vld [vmem:[#allocation8 + $0x1d4] sm:$0xf]
    %v919 = vld [vmem:[#allocation8 + $0x1d8] sm:$0xf]
    %v920 = vld [vmem:[#allocation8 + $0x1dc] sm:$0xf]
    %v921 = vld [vmem:[#allocation8 + $0x1e0] sm:$0xf]
    %v922 = vld [vmem:[#allocation8 + $0x1e4] sm:$0xf]
    %v923 = vld [vmem:[#allocation8 + $0x1e8] sm:$0xf]
    %v924 = vld [vmem:[#allocation8 + $0x1ec] sm:$0xf]
    %v925 = vld [vmem:[#allocation8 + $0x1f0] sm:$0xf]
    %v926 = vld [vmem:[#allocation8 + $0x1f4] sm:$0xf]
    %v927 = vld [vmem:[#allocation8 + $0x1f8] sm:$0xf]
    %v928 = vld [vmem:[#allocation8 + $0x1fc] sm:$0xf]
    %v929 = vld [vmem:[#allocation8 + $0x200] sm:$0xf]
    %v930 = vld [vmem:[#allocation8 + $0x204] sm:$0xf]
    %v931 = vld [vmem:[#allocation8 + $0x208] sm:$0xf]
    %v932 = vld [vmem:[#allocation8 + $0x20c] sm:$0xf]
    %v933 = vld [vmem:[#allocation8 + $0x210] sm:$0xf]
    %v934 = vld [vmem:[#allocation8 + $0x214] sm:$0xf]
    %v935 = vld [vmem:[#allocation8 + $0x218] sm:$0xf]
    %v936 = vld [vmem:[#allocation8 + $0x21c] sm:$0xf]
    %v937 = vld [vmem:[#allocation8 + $0x220] sm:$0xf]
    %v938 = vld [vmem:[#allocation8 + $0x224] sm:$0xf]
    %v939 = vld [vmem:[#allocation8 + $0x228] sm:$0xf]
    %v940 = vld [vmem:[#allocation8 + $0x22c] sm:$0xf]
    %v941 = vld [vmem:[#allocation8 + $0x230] sm:$0xf]
    %v942 = vld [vmem:[#allocation8 + $0x234] sm:$0xf]
    %v943 = vld [vmem:[#allocation8 + $0x238] sm:$0xf]
    %v944 = vld [vmem:[#allocation8 + $0x23c] sm:$0xf]
    %v945 = vld [vmem:[#allocation8 + $0x240] sm:$0xf]
    %v946 = vld [vmem:[#allocation8 + $0x244] sm:$0xf]
    %v947 = vld [vmem:[#allocation8 + $0x248] sm:$0xf]
    %v948 = vld [vmem:[#allocation8 + $0x24c] sm:$0xf]
    %v949 = vld [vmem:[#allocation8 + $0x250] sm:$0xf]
    %v950 = vld [vmem:[#allocation8 + $0x254] sm:$0xf]
    %v951 = vld [vmem:[#allocation8 + $0x258] sm:$0xf]
    %v952 = vld [vmem:[#allocation8 + $0x25c] sm:$0xf]
    %v953 = vld [vmem:[#allocation8 + $0x260] sm:$0xf]
    %v954 = vld [vmem:[#allocation8 + $0x264] sm:$0xf]
    %v955 = vld [vmem:[#allocation8 + $0x268] sm:$0xf]
    %v956 = vld [vmem:[#allocation8 + $0x26c] sm:$0xf]
    %v957 = vld [vmem:[#allocation8 + $0x270] sm:$0xf]
    %v958 = vld [vmem:[#allocation8 + $0x274] sm:$0xf]
    %v959 = vld [vmem:[#allocation8 + $0x278] sm:$0xf]
    %v960 = vld [vmem:[#allocation8 + $0x27c] sm:$0xf]
    %v961 = vld [vmem:[#allocation8 + $0x280] sm:$0xf]
    %v962 = vld [vmem:[#allocation8 + $0x284] sm:$0xf]
    %v963 = vld [vmem:[#allocation8 + $0x288] sm:$0xf]
    %v964 = vld [vmem:[#allocation8 + $0x28c] sm:$0xf]
    %v965 = vld [vmem:[#allocation8 + $0x290] sm:$0xf]
    %v966 = vld [vmem:[#allocation8 + $0x294] sm:$0xf]
    %v967 = vld [vmem:[#allocation8 + $0x298] sm:$0xf]
    %v968 = vld [vmem:[#allocation8 + $0x29c] sm:$0xf]
    %v969 = vld [vmem:[#allocation8 + $0x2a0] sm:$0xf]
    %v970 = vld [vmem:[#allocation8 + $0x2a4] sm:$0xf]
    %v971 = vld [vmem:[#allocation8 + $0x2a8] sm:$0xf]
    %v972 = vld [vmem:[#allocation8 + $0x2ac] sm:$0xf]
    %v973 = vld [vmem:[#allocation8 + $0x2b0] sm:$0xf]
    %v974 = vld [vmem:[#allocation8 + $0x2b4] sm:$0xf]
    %v975 = vld [vmem:[#allocation8 + $0x2b8] sm:$0xf]
    %v976 = vld [vmem:[#allocation8 + $0x2bc] sm:$0xf]
    %v977 = vld [vmem:[#allocation8 + $0x2c0] sm:$0xf]
    %v978 = vld [vmem:[#allocation8 + $0x2c4] sm:$0xf]
    %v979 = vld [vmem:[#allocation8 + $0x2c8] sm:$0xf]
    %v980 = vld [vmem:[#allocation8 + $0x2cc] sm:$0xf]
    %v981 = vld [vmem:[#allocation8 + $0x2d0] sm:$0xf]
    %v982 = vld [vmem:[#allocation8 + $0x2d4] sm:$0xf]
    %v983 = vld [vmem:[#allocation8 + $0x2d8] sm:$0xf]
    %v984 = vld [vmem:[#allocation8 + $0x2dc] sm:$0xf]
    %v985 = vld [vmem:[#allocation8 + $0x2e0] sm:$0xf]
    %v986 = vld [vmem:[#allocation8 + $0x2e4] sm:$0xf]
    %v987 = vld [vmem:[#allocation8 + $0x2e8] sm:$0xf]
    %v988 = vld [vmem:[#allocation8 + $0x2ec] sm:$0xf]
    %v989 = vld [vmem:[#allocation8 + $0x2f0] sm:$0xf]
    %v990 = vld [vmem:[#allocation8 + $0x2f4] sm:$0xf]
    %v991 = vld [vmem:[#allocation8 + $0x2f8] sm:$0xf]
    %v992 = vld [vmem:[#allocation8 + $0x2fc] sm:$0xf]
    %v993 = vld [vmem:[#allocation8 + $0x300] sm:$0xf]
    %v994 = vld [vmem:[#allocation8 + $0x304] sm:$0xf]
    %v995 = vld [vmem:[#allocation8 + $0x308] sm:$0xf]
    %v996 = vld [vmem:[#allocation8 + $0x30c] sm:$0xf]
    %v997 = vld [vmem:[#allocation8 + $0x310] sm:$0xf]
    %v998 = vld [vmem:[#allocation8 + $0x314] sm:$0xf]
    %v999 = vld [vmem:[#allocation8 + $0x318] sm:$0xf]
    %v1000 = vld [vmem:[#allocation8 + $0x31c] sm:$0xf]
    %v1001 = vld [vmem:[#allocation8 + $0x320] sm:$0xf]
    %v1002 = vld [vmem:[#allocation8 + $0x324] sm:$0xf]
    %v1003 = vld [vmem:[#allocation8 + $0x328] sm:$0xf]
    %v1004 = vld [vmem:[#allocation8 + $0x32c] sm:$0xf]
    %v1005 = vld [vmem:[#allocation8 + $0x330] sm:$0xf]
    %v1006 = vld [vmem:[#allocation8 + $0x334] sm:$0xf]
    %v1007 = vld [vmem:[#allocation8 + $0x338] sm:$0xf]
    %v1008 = vld [vmem:[#allocation8 + $0x33c] sm:$0xf]
    %v1009 = vld [vmem:[#allocation8 + $0x340] sm:$0xf]
    %v1010 = vld [vmem:[#allocation8 + $0x344] sm:$0xf]
    %v1011 = vld [vmem:[#allocation8 + $0x348] sm:$0xf]
    %v1012 = vld [vmem:[#allocation8 + $0x34c] sm:$0xf]
    %v1013 = vld [vmem:[#allocation8 + $0x350] sm:$0xf]
    %v1014 = vld [vmem:[#allocation8 + $0x354] sm:$0xf]
    %v1015 = vld [vmem:[#allocation8 + $0x358] sm:$0xf]
    %v1016 = vld [vmem:[#allocation8 + $0x35c] sm:$0xf]
    %v1017 = vld [vmem:[#allocation8 + $0x360] sm:$0xf]
    %v1018 = vld [vmem:[#allocation8 + $0x364] sm:$0xf]
    %v1019 = vld [vmem:[#allocation8 + $0x368] sm:$0xf]
    %v1020 = vld [vmem:[#allocation8 + $0x36c] sm:$0xf]
    %v1021 = vld [vmem:[#allocation8 + $0x370] sm:$0xf]
    %v1022 = vld [vmem:[#allocation8 + $0x374] sm:$0xf]
    %v1023 = vld [vmem:[#allocation8 + $0x378] sm:$0xf]
    %v1024 = vld [vmem:[#allocation8 + $0x37c] sm:$0xf]
    %v1025 = vld [vmem:[#allocation8 + $0x380] sm:$0xf]
    %v1026 = vld [vmem:[#allocation8 + $0x384] sm:$0xf]
    %v1027 = vld [vmem:[#allocation8 + $0x388] sm:$0xf]
    %v1028 = vld [vmem:[#allocation8 + $0x38c] sm:$0xf]
    %v1029 = vld [vmem:[#allocation8 + $0x390] sm:$0xf]
    %v1030 = vld [vmem:[#allocation8 + $0x394] sm:$0xf]
    %v1031 = vld [vmem:[#allocation8 + $0x398] sm:$0xf]
    %v1032 = vld [vmem:[#allocation8 + $0x39c] sm:$0xf]
    %v1033 = vld [vmem:[#allocation8 + $0x3a0] sm:$0xf]
    %v1034 = vld [vmem:[#allocation8 + $0x3a4] sm:$0xf]
    %v1035 = vld [vmem:[#allocation8 + $0x3a8] sm:$0xf]
    %v1036 = vld [vmem:[#allocation8 + $0x3ac] sm:$0xf]
    %v1037 = vld [vmem:[#allocation8 + $0x3b0] sm:$0xf]
    %v1038 = vld [vmem:[#allocation8 + $0x3b4] sm:$0xf]
    %v1039 = vld [vmem:[#allocation8 + $0x3b8] sm:$0xf]
    %v1040 = vld [vmem:[#allocation8 + $0x3bc] sm:$0xf]
    %v1041 = vld [vmem:[#allocation8 + $0x3c0] sm:$0xf]
    %v1042 = vld [vmem:[#allocation8 + $0x3c4] sm:$0xf]
    %v1043 = vld [vmem:[#allocation8 + $0x3c8] sm:$0xf]
    %v1044 = vld [vmem:[#allocation8 + $0x3cc] sm:$0xf]
    %v1045 = vld [vmem:[#allocation8 + $0x3d0] sm:$0xf]
    %v1046 = vld [vmem:[#allocation8 + $0x3d4] sm:$0xf]
    %v1047 = vld [vmem:[#allocation8 + $0x3d8] sm:$0xf]
    %v1048 = vld [vmem:[#allocation8 + $0x3dc] sm:$0xf]
    %v1049 = vld [vmem:[#allocation8 + $0x3e0] sm:$0xf]
    %v1050 = vld [vmem:[#allocation8 + $0x3e4] sm:$0xf]
    %v1051 = vld [vmem:[#allocation8 + $0x3e8] sm:$0xf]
    %v1052 = vld [vmem:[#allocation8 + $0x3ec] sm:$0xf]
    %v1053 = vld [vmem:[#allocation8 + $0x3f0] sm:$0xf]
    %v1054 = vld [vmem:[#allocation8 + $0x3f4] sm:$0xf]
    %v1055 = vld [vmem:[#allocation8 + $0x3f8] sm:$0xf]
    %v1056 = vld [vmem:[#allocation8 + $0x3fc] sm:$0xf]
    %v1057 = vld [vmem:[%s4] sm:$0x1]
    %v1059 = vlaneseq
    %v1060 = vshrl.u32 %v1059, 7
    %v1061 = vsub.s32 0, %v1060
    %v1062 = vrot.slane %v1057, %v1061
    %v1320 = vunpack.c.l.b16 %v801
    %v1321 = vunpack.c.l.b16 %v802
    %v1322 = vunpack.c.l.b16 %v803
    %v1323 = vunpack.c.l.b16 %v804
    %v1324 = vunpack.c.l.b16 %v805
    %v1325 = vunpack.c.l.b16 %v806
    %v1326 = vunpack.c.l.b16 %v807
    %v1327 = vunpack.c.l.b16 %v808
    %v1328 = vunpack.c.l.b16 %v809
    %v1329 = vunpack.c.l.b16 %v810
    %v1330 = vunpack.c.l.b16 %v811
    %v1331 = vunpack.c.l.b16 %v812
    %v1332 = vunpack.c.l.b16 %v813
    %v1333 = vunpack.c.l.b16 %v814
    %v1334 = vunpack.c.l.b16 %v815
    %v1335 = vunpack.c.l.b16 %v816
    %v1336 = vunpack.c.l.b16 %v817
    %v1337 = vunpack.c.l.b16 %v818
    %v1338 = vunpack.c.l.b16 %v819
    %v1339 = vunpack.c.l.b16 %v820
    %v1340 = vunpack.c.l.b16 %v821
    %v1341 = vunpack.c.l.b16 %v822
    %v1342 = vunpack.c.l.b16 %v823
    %v1343 = vunpack.c.l.b16 %v824
    %v1344 = vunpack.c.l.b16 %v825
    %v1345 = vunpack.c.l.b16 %v826
    %v1346 = vunpack.c.l.b16 %v827
    %v1347 = vunpack.c.l.b16 %v828
    %v1348 = vunpack.c.l.b16 %v829
    %v1349 = vunpack.c.l.b16 %v830
    %v1350 = vunpack.c.l.b16 %v831
    %v1351 = vunpack.c.l.b16 %v832
    %v1352 = vunpack.c.l.b16 %v833
    %v1353 = vunpack.c.l.b16 %v834
    %v1354 = vunpack.c.l.b16 %v835
    %v1355 = vunpack.c.l.b16 %v836
    %v1356 = vunpack.c.l.b16 %v837
    %v1357 = vunpack.c.l.b16 %v838
    %v1358 = vunpack.c.l.b16 %v839
    %v1359 = vunpack.c.l.b16 %v840
    %v1360 = vunpack.c.l.b16 %v841
    %v1361 = vunpack.c.l.b16 %v842
    %v1362 = vunpack.c.l.b16 %v843
    %v1363 = vunpack.c.l.b16 %v844
    %v1364 = vunpack.c.l.b16 %v845
    %v1365 = vunpack.c.l.b16 %v846
    %v1366 = vunpack.c.l.b16 %v847
    %v1367 = vunpack.c.l.b16 %v848
    %v1368 = vunpack.c.l.b16 %v849
    %v1369 = vunpack.c.l.b16 %v850
    %v1370 = vunpack.c.l.b16 %v851
    %v1371 = vunpack.c.l.b16 %v852
    %v1372 = vunpack.c.l.b16 %v853
    %v1373 = vunpack.c.l.b16 %v854
    %v1374 = vunpack.c.l.b16 %v855
    %v1375 = vunpack.c.l.b16 %v856
    %v1376 = vunpack.c.l.b16 %v857
    %v1377 = vunpack.c.l.b16 %v858
    %v1378 = vunpack.c.l.b16 %v859
    %v1379 = vunpack.c.l.b16 %v860
    %v1380 = vunpack.c.l.b16 %v861
    %v1381 = vunpack.c.l.b16 %v862
    %v1382 = vunpack.c.l.b16 %v863
    %v1383 = vunpack.c.l.b16 %v864
    %v1384 = vunpack.c.l.b16 %v865
    %v1385 = vunpack.c.l.b16 %v866
    %v1386 = vunpack.c.l.b16 %v867
    %v1387 = vunpack.c.l.b16 %v868
    %v1388 = vunpack.c.l.b16 %v869
    %v1389 = vunpack.c.l.b16 %v870
    %v1390 = vunpack.c.l.b16 %v871
    %v1391 = vunpack.c.l.b16 %v872
    %v1392 = vunpack.c.l.b16 %v873
    %v1393 = vunpack.c.l.b16 %v874
    %v1394 = vunpack.c.l.b16 %v875
    %v1395 = vunpack.c.l.b16 %v876
    %v1396 = vunpack.c.l.b16 %v877
    %v1397 = vunpack.c.l.b16 %v878
    %v1398 = vunpack.c.l.b16 %v879
    %v1399 = vunpack.c.l.b16 %v880
    %v1400 = vunpack.c.l.b16 %v881
    %v1401 = vunpack.c.l.b16 %v882
    %v1402 = vunpack.c.l.b16 %v883
    %v1403 = vunpack.c.l.b16 %v884
    %v1404 = vunpack.c.l.b16 %v885
    %v1405 = vunpack.c.l.b16 %v886
    %v1406 = vunpack.c.l.b16 %v887
    %v1407 = vunpack.c.l.b16 %v888
    %v1408 = vunpack.c.l.b16 %v889
    %v1409 = vunpack.c.l.b16 %v890
    %v1410 = vunpack.c.l.b16 %v891
    %v1411 = vunpack.c.l.b16 %v892
    %v1412 = vunpack.c.l.b16 %v893
    %v1413 = vunpack.c.l.b16 %v894
    %v1414 = vunpack.c.l.b16 %v895
    %v1415 = vunpack.c.l.b16 %v896
    %v1416 = vunpack.c.l.b16 %v897
    %v1417 = vunpack.c.l.b16 %v898
    %v1418 = vunpack.c.l.b16 %v899
    %v1419 = vunpack.c.l.b16 %v900
    %v1420 = vunpack.c.l.b16 %v901
    %v1421 = vunpack.c.l.b16 %v902
    %v1422 = vunpack.c.l.b16 %v903
    %v1423 = vunpack.c.l.b16 %v904
    %v1424 = vunpack.c.l.b16 %v905
    %v1425 = vunpack.c.l.b16 %v906
    %v1426 = vunpack.c.l.b16 %v907
    %v1427 = vunpack.c.l.b16 %v908
    %v1428 = vunpack.c.l.b16 %v909
    %v1429 = vunpack.c.l.b16 %v910
    %v1430 = vunpack.c.l.b16 %v911
    %v1431 = vunpack.c.l.b16 %v912
    %v1432 = vunpack.c.l.b16 %v913
    %v1433 = vunpack.c.l.b16 %v914
    %v1434 = vunpack.c.l.b16 %v915
    %v1435 = vunpack.c.l.b16 %v916
    %v1436 = vunpack.c.l.b16 %v917
    %v1437 = vunpack.c.l.b16 %v918
    %v1438 = vunpack.c.l.b16 %v919
    %v1439 = vunpack.c.l.b16 %v920
    %v1440 = vunpack.c.l.b16 %v921
    %v1441 = vunpack.c.l.b16 %v922
    %v1442 = vunpack.c.l.b16 %v923
    %v1443 = vunpack.c.l.b16 %v924
    %v1444 = vunpack.c.l.b16 %v925
    %v1445 = vunpack.c.l.b16 %v926
    %v1446 = vunpack.c.l.b16 %v927
    %v1447 = vunpack.c.l.b16 %v928
    %v1448 = vunpack.c.l.b16 %v929
    %v1449 = vunpack.c.l.b16 %v930
    %v1450 = vunpack.c.l.b16 %v931
    %v1451 = vunpack.c.l.b16 %v932
    %v1452 = vunpack.c.l.b16 %v933
    %v1453 = vunpack.c.l.b16 %v934
    %v1454 = vunpack.c.l.b16 %v935
    %v1455 = vunpack.c.l.b16 %v936
    %v1456 = vunpack.c.l.b16 %v937
    %v1457 = vunpack.c.l.b16 %v938
    %v1458 = vunpack.c.l.b16 %v939
    %v1459 = vunpack.c.l.b16 %v940
    %v1460 = vunpack.c.l.b16 %v941
    %v1461 = vunpack.c.l.b16 %v942
    %v1462 = vunpack.c.l.b16 %v943
    %v1463 = vunpack.c.l.b16 %v944
    %v1464 = vunpack.c.l.b16 %v945
    %v1465 = vunpack.c.l.b16 %v946
    %v1466 = vunpack.c.l.b16 %v947
    %v1467 = vunpack.c.l.b16 %v948
    %v1468 = vunpack.c.l.b16 %v949
    %v1469 = vunpack.c.l.b16 %v950
    %v1470 = vunpack.c.l.b16 %v951
    %v1471 = vunpack.c.l.b16 %v952
    %v1472 = vunpack.c.l.b16 %v953
    %v1473 = vunpack.c.l.b16 %v954
    %v1474 = vunpack.c.l.b16 %v955
    %v1475 = vunpack.c.l.b16 %v956
    %v1476 = vunpack.c.l.b16 %v957
    %v1477 = vunpack.c.l.b16 %v958
    %v1478 = vunpack.c.l.b16 %v959
    %v1479 = vunpack.c.l.b16 %v960
    %v1480 = vunpack.c.l.b16 %v961
    %v1481 = vunpack.c.l.b16 %v962
    %v1482 = vunpack.c.l.b16 %v963
    %v1483 = vunpack.c.l.b16 %v964
    %v1484 = vunpack.c.l.b16 %v965
    %v1485 = vunpack.c.l.b16 %v966
    %v1486 = vunpack.c.l.b16 %v967
    %v1487 = vunpack.c.l.b16 %v968
    %v1488 = vunpack.c.l.b16 %v969
    %v1489 = vunpack.c.l.b16 %v970
    %v1490 = vunpack.c.l.b16 %v971
    %v1491 = vunpack.c.l.b16 %v972
    %v1492 = vunpack.c.l.b16 %v973
    %v1493 = vunpack.c.l.b16 %v974
    %v1494 = vunpack.c.l.b16 %v975
    %v1495 = vunpack.c.l.b16 %v976
    %v1496 = vunpack.c.l.b16 %v977
    %v1497 = vunpack.c.l.b16 %v978
    %v1498 = vunpack.c.l.b16 %v979
    %v1499 = vunpack.c.l.b16 %v980
    %v1500 = vunpack.c.l.b16 %v981
    %v1501 = vunpack.c.l.b16 %v982
    %v1502 = vunpack.c.l.b16 %v983
    %v1503 = vunpack.c.l.b16 %v984
    %v1504 = vunpack.c.l.b16 %v985
    %v1505 = vunpack.c.l.b16 %v986
    %v1506 = vunpack.c.l.b16 %v987
    %v1507 = vunpack.c.l.b16 %v988
    %v1508 = vunpack.c.l.b16 %v989
    %v1509 = vunpack.c.l.b16 %v990
    %v1510 = vunpack.c.l.b16 %v991
    %v1511 = vunpack.c.l.b16 %v992
    %v1512 = vunpack.c.l.b16 %v993
    %v1513 = vunpack.c.l.b16 %v994
    %v1514 = vunpack.c.l.b16 %v995
    %v1515 = vunpack.c.l.b16 %v996
    %v1516 = vunpack.c.l.b16 %v997
    %v1517 = vunpack.c.l.b16 %v998
    %v1518 = vunpack.c.l.b16 %v999
    %v1519 = vunpack.c.l.b16 %v1000
    %v1520 = vunpack.c.l.b16 %v1001
    %v1521 = vunpack.c.l.b16 %v1002
    %v1522 = vunpack.c.l.b16 %v1003
    %v1523 = vunpack.c.l.b16 %v1004
    %v1524 = vunpack.c.l.b16 %v1005
    %v1525 = vunpack.c.l.b16 %v1006
    %v1526 = vunpack.c.l.b16 %v1007
    %v1527 = vunpack.c.l.b16 %v1008
    %v1528 = vunpack.c.l.b16 %v1009
    %v1529 = vunpack.c.l.b16 %v1010
    %v1530 = vunpack.c.l.b16 %v1011
    %v1531 = vunpack.c.l.b16 %v1012
    %v1532 = vunpack.c.l.b16 %v1013
    %v1533 = vunpack.c.l.b16 %v1014
    %v1534 = vunpack.c.l.b16 %v1015
    %v1535 = vunpack.c.l.b16 %v1016
    %v1536 = vunpack.c.l.b16 %v1017
    %v1537 = vunpack.c.l.b16 %v1018
    %v1538 = vunpack.c.l.b16 %v1019
    %v1539 = vunpack.c.l.b16 %v1020
    %v1540 = vunpack.c.l.b16 %v1021
    %v1541 = vunpack.c.l.b16 %v1022
    %v1542 = vunpack.c.l.b16 %v1023
    %v1543 = vunpack.c.l.b16 %v1024
    %v1544 = vunpack.c.l.b16 %v1025
    %v1545 = vunpack.c.l.b16 %v1026
    %v1546 = vunpack.c.l.b16 %v1027
    %v1547 = vunpack.c.l.b16 %v1028
    %v1548 = vunpack.c.l.b16 %v1029
    %v1549 = vunpack.c.l.b16 %v1030
    %v1550 = vunpack.c.l.b16 %v1031
    %v1551 = vunpack.c.l.b16 %v1032
    %v1552 = vunpack.c.l.b16 %v1033
    %v1553 = vunpack.c.l.b16 %v1034
    %v1554 = vunpack.c.l.b16 %v1035
    %v1555 = vunpack.c.l.b16 %v1036
    %v1556 = vunpack.c.l.b16 %v1037
    %v1557 = vunpack.c.l.b16 %v1038
    %v1558 = vunpack.c.l.b16 %v1039
    %v1559 = vunpack.c.l.b16 %v1040
    %v1560 = vunpack.c.l.b16 %v1041
    %v1561 = vunpack.c.l.b16 %v1042
    %v1562 = vunpack.c.l.b16 %v1043
    %v1563 = vunpack.c.l.b16 %v1044
    %v1564 = vunpack.c.l.b16 %v1045
    %v1565 = vunpack.c.l.b16 %v1046
    %v1566 = vunpack.c.l.b16 %v1047
    %v1567 = vunpack.c.l.b16 %v1048
    %v1568 = vunpack.c.l.b16 %v1049
    %v1569 = vunpack.c.l.b16 %v1050
    %v1570 = vunpack.c.l.b16 %v1051
    %v1571 = vunpack.c.l.b16 %v1052
    %v1572 = vunpack.c.l.b16 %v1053
    %v1573 = vunpack.c.l.b16 %v1054
    %v1574 = vunpack.c.l.b16 %v1055
    %v1575 = vunpack.c.l.b16 %v1056
    %v1576 = vpack.c.b16 %v1321, %v1320
    %v1577 = vpack.c.b16 %v1323, %v1322
    %v1578 = vpack.c.b16 %v1325, %v1324
    %v1579 = vpack.c.b16 %v1327, %v1326
    %v1580 = vpack.c.b16 %v1329, %v1328
    %v1581 = vpack.c.b16 %v1331, %v1330
    %v1582 = vpack.c.b16 %v1333, %v1332
    %v1583 = vpack.c.b16 %v1335, %v1334
    %v1584 = vpack.c.b16 %v1337, %v1336
    %v1585 = vpack.c.b16 %v1339, %v1338
    %v1586 = vpack.c.b16 %v1341, %v1340
    %v1587 = vpack.c.b16 %v1343, %v1342
    %v1588 = vpack.c.b16 %v1345, %v1344
    %v1589 = vpack.c.b16 %v1347, %v1346
    %v1590 = vpack.c.b16 %v1349, %v1348
    %v1591 = vpack.c.b16 %v1351, %v1350
    %v1592 = vpack.c.b16 %v1353, %v1352
    %v1593 = vpack.c.b16 %v1355, %v1354
    %v1594 = vpack.c.b16 %v1357, %v1356
    %v1595 = vpack.c.b16 %v1359, %v1358
    %v1596 = vpack.c.b16 %v1361, %v1360
    %v1597 = vpack.c.b16 %v1363, %v1362
    %v1598 = vpack.c.b16 %v1365, %v1364
    %v1599 = vpack.c.b16 %v1367, %v1366
    %v1600 = vpack.c.b16 %v1369, %v1368
    %v1601 = vpack.c.b16 %v1371, %v1370
    %v1602 = vpack.c.b16 %v1373, %v1372
    %v1603 = vpack.c.b16 %v1375, %v1374
    %v1604 = vpack.c.b16 %v1377, %v1376
    %v1605 = vpack.c.b16 %v1379, %v1378
    %v1606 = vpack.c.b16 %v1381, %v1380
    %v1607 = vpack.c.b16 %v1383, %v1382
    %v1608 = vpack.c.b16 %v1385, %v1384
    %v1609 = vpack.c.b16 %v1387, %v1386
    %v1610 = vpack.c.b16 %v1389, %v1388
    %v1611 = vpack.c.b16 %v1391, %v1390
    %v1612 = vpack.c.b16 %v1393, %v1392
    %v1613 = vpack.c.b16 %v1395, %v1394
    %v1614 = vpack.c.b16 %v1397, %v1396
    %v1615 = vpack.c.b16 %v1399, %v1398
    %v1616 = vpack.c.b16 %v1401, %v1400
    %v1617 = vpack.c.b16 %v1403, %v1402
    %v1618 = vpack.c.b16 %v1405, %v1404
    %v1619 = vpack.c.b16 %v1407, %v1406
    %v1620 = vpack.c.b16 %v1409, %v1408
    %v1621 = vpack.c.b16 %v1411, %v1410
    %v1622 = vpack.c.b16 %v1413, %v1412
    %v1623 = vpack.c.b16 %v1415, %v1414
    %v1624 = vpack.c.b16 %v1417, %v1416
    %v1625 = vpack.c.b16 %v1419, %v1418
    %v1626 = vpack.c.b16 %v1421, %v1420
    %v1627 = vpack.c.b16 %v1423, %v1422
    %v1628 = vpack.c.b16 %v1425, %v1424
    %v1629 = vpack.c.b16 %v1427, %v1426
    %v1630 = vpack.c.b16 %v1429, %v1428
    %v1631 = vpack.c.b16 %v1431, %v1430
    %v1632 = vpack.c.b16 %v1433, %v1432
    %v1633 = vpack.c.b16 %v1435, %v1434
    %v1634 = vpack.c.b16 %v1437, %v1436
    %v1635 = vpack.c.b16 %v1439, %v1438
    %v1636 = vpack.c.b16 %v1441, %v1440
    %v1637 = vpack.c.b16 %v1443, %v1442
    %v1638 = vpack.c.b16 %v1445, %v1444
    %v1639 = vpack.c.b16 %v1447, %v1446
    %v1640 = vpack.c.b16 %v1449, %v1448
    %v1641 = vpack.c.b16 %v1451, %v1450
    %v1642 = vpack.c.b16 %v1453, %v1452
    %v1643 = vpack.c.b16 %v1455, %v1454
    %v1644 = vpack.c.b16 %v1457, %v1456
    %v1645 = vpack.c.b16 %v1459, %v1458
    %v1646 = vpack.c.b16 %v1461, %v1460
    %v1647 = vpack.c.b16 %v1463, %v1462
    %v1648 = vpack.c.b16 %v1465, %v1464
    %v1649 = vpack.c.b16 %v1467, %v1466
    %v1650 = vpack.c.b16 %v1469, %v1468
    %v1651 = vpack.c.b16 %v1471, %v1470
    %v1652 = vpack.c.b16 %v1473, %v1472
    %v1653 = vpack.c.b16 %v1475, %v1474
    %v1654 = vpack.c.b16 %v1477, %v1476
    %v1655 = vpack.c.b16 %v1479, %v1478
    %v1656 = vpack.c.b16 %v1481, %v1480
    %v1657 = vpack.c.b16 %v1483, %v1482
    %v1658 = vpack.c.b16 %v1485, %v1484
    %v1659 = vpack.c.b16 %v1487, %v1486
    %v1660 = vpack.c.b16 %v1489, %v1488
    %v1661 = vpack.c.b16 %v1491, %v1490
    %v1662 = vpack.c.b16 %v1493, %v1492
    %v1663 = vpack.c.b16 %v1495, %v1494
    %v1664 = vpack.c.b16 %v1497, %v1496
    %v1665 = vpack.c.b16 %v1499, %v1498
    %v1666 = vpack.c.b16 %v1501, %v1500
    %v1667 = vpack.c.b16 %v1503, %v1502
    %v1668 = vpack.c.b16 %v1505, %v1504
    %v1669 = vpack.c.b16 %v1507, %v1506
    %v1670 = vpack.c.b16 %v1509, %v1508
    %v1671 = vpack.c.b16 %v1511, %v1510
    %v1672 = vpack.c.b16 %v1513, %v1512
    %v1673 = vpack.c.b16 %v1515, %v1514
    %v1674 = vpack.c.b16 %v1517, %v1516
    %v1675 = vpack.c.b16 %v1519, %v1518
    %v1676 = vpack.c.b16 %v1521, %v1520
    %v1677 = vpack.c.b16 %v1523, %v1522
    %v1678 = vpack.c.b16 %v1525, %v1524
    %v1679 = vpack.c.b16 %v1527, %v1526
    %v1680 = vpack.c.b16 %v1529, %v1528
    %v1681 = vpack.c.b16 %v1531, %v1530
    %v1682 = vpack.c.b16 %v1533, %v1532
    %v1683 = vpack.c.b16 %v1535, %v1534
    %v1684 = vpack.c.b16 %v1537, %v1536
    %v1685 = vpack.c.b16 %v1539, %v1538
    %v1686 = vpack.c.b16 %v1541, %v1540
    %v1687 = vpack.c.b16 %v1543, %v1542
    %v1688 = vpack.c.b16 %v1545, %v1544
    %v1689 = vpack.c.b16 %v1547, %v1546
    %v1690 = vpack.c.b16 %v1549, %v1548
    %v1691 = vpack.c.b16 %v1551, %v1550
    %v1692 = vpack.c.b16 %v1553, %v1552
    %v1693 = vpack.c.b16 %v1555, %v1554
    %v1694 = vpack.c.b16 %v1557, %v1556
    %v1695 = vpack.c.b16 %v1559, %v1558
    %v1696 = vpack.c.b16 %v1561, %v1560
    %v1697 = vpack.c.b16 %v1563, %v1562
    %v1698 = vpack.c.b16 %v1565, %v1564
    %v1699 = vpack.c.b16 %v1567, %v1566
    %v1700 = vpack.c.b16 %v1569, %v1568
    %v1701 = vpack.c.b16 %v1571, %v1570
    %v1702 = vpack.c.b16 %v1573, %v1572
    %v1703 = vpack.c.b16 %v1575, %v1574
    %1832 = vmatprep.subr.bf16.mxu0 0
    %1833 = vmatpush1.bf16.msra.mxu0 %v1576
    %1834 = vmatprep.subr.bf16.mxu0 0
    %1835 = vmatpush1.bf16.msra.mxu0 %v1577
    %1836 = vmatprep.subr.bf16.mxu0 0
    %1837 = vmatpush1.bf16.msra.mxu0 %v1578
    %1838 = vmatprep.subr.bf16.mxu0 0
    %1839 = vmatpush1.bf16.msra.mxu0 %v1579
    %1840 = vmatprep.subr.bf16.mxu0 0
    %1841 = vmatpush1.bf16.msra.mxu0 %v1580
    %1842 = vmatprep.subr.bf16.mxu0 0
    %1843 = vmatpush1.bf16.msra.mxu0 %v1581
    %1844 = vmatprep.subr.bf16.mxu0 0
    %1845 = vmatpush1.bf16.msra.mxu0 %v1582
    %1846 = vmatprep.subr.bf16.mxu0 0
    %1847 = vmatpush1.bf16.msra.mxu0 %v1583
    %1848 = vmatprep.subr.bf16.mxu0 0
    %1849 = vmatpush1.bf16.msra.mxu0 %v1584
    %1850 = vmatprep.subr.bf16.mxu0 0
    %1851 = vmatpush1.bf16.msra.mxu0 %v1585
    %1852 = vmatprep.subr.bf16.mxu0 0
    %1853 = vmatpush1.bf16.msra.mxu0 %v1586
    %1854 = vmatprep.subr.bf16.mxu0 0
    %1855 = vmatpush1.bf16.msra.mxu0 %v1587
    %1856 = vmatprep.subr.bf16.mxu0 0
    %1857 = vmatpush1.bf16.msra.mxu0 %v1588
    %1858 = vmatprep.subr.bf16.mxu0 0
    %1859 = vmatpush1.bf16.msra.mxu0 %v1589
    %1860 = vmatprep.subr.bf16.mxu0 0
    %1861 = vmatpush1.bf16.msra.mxu0 %v1590
    %1862 = vmatprep.subr.bf16.mxu0 0
    %1863 = vmatpush1.bf16.msra.mxu0 %v1591
    %1864 = vmatprep.mubr.bf16.mxu0 %v786
    %1865 = vmatmul.mubr.bf16.gmra.mrb[0].mxu0 %v785
    %v1866 = vpop.f32.mrb[0].mxu0
    %v1867 = vadd.f32 %v1062, %v1866
    %v1868 = vpop.f32.mrb[0].mxu0
    %v1869 = vpop.f32.mrb[0].mxu0
    %v1870 = vpop.f32.mrb[0].mxu0
    %1871 = vdwg.mxu0
    %1872 = vmatprep.subr.bf16.mxu0 0
    %1873 = vmatpush1.bf16.msra.mxu0 %v1592
    %1874 = vmatprep.subr.bf16.mxu0 0
    %1875 = vmatpush1.bf16.msra.mxu0 %v1593
    %1876 = vmatprep.subr.bf16.mxu0 0
    %1877 = vmatpush1.bf16.msra.mxu0 %v1594
    %1878 = vmatprep.subr.bf16.mxu0 0
    %1879 = vmatpush1.bf16.msra.mxu0 %v1595
    %1880 = vmatprep.subr.bf16.mxu0 0
    %1881 = vmatpush1.bf16.msra.mxu0 %v1596
    %1882 = vmatprep.subr.bf16.mxu0 0
    %1883 = vmatpush1.bf16.msra.mxu0 %v1597
    %1884 = vmatprep.subr.bf16.mxu0 0
    %1885 = vmatpush1.bf16.msra.mxu0 %v1598
    %1886 = vmatprep.subr.bf16.mxu0 0
    %1887 = vmatpush1.bf16.msra.mxu0 %v1599
    %1888 = vmatprep.subr.bf16.mxu0 0
    %1889 = vmatpush1.bf16.msra.mxu0 %v1600
    %1890 = vmatprep.subr.bf16.mxu0 0
    %1891 = vmatpush1.bf16.msra.mxu0 %v1601
    %1892 = vmatprep.subr.bf16.mxu0 0
    %1893 = vmatpush1.bf16.msra.mxu0 %v1602
    %1894 = vmatprep.subr.bf16.mxu0 0
    %1895 = vmatpush1.bf16.msra.mxu0 %v1603
    %1896 = vmatprep.subr.bf16.mxu0 0
    %1897 = vmatpush1.bf16.msra.mxu0 %v1604
    %1898 = vmatprep.subr.bf16.mxu0 0
    %1899 = vmatpush1.bf16.msra.mxu0 %v1605
    %1900 = vmatprep.subr.bf16.mxu0 0
    %1901 = vmatpush1.bf16.msra.mxu0 %v1606
    %1902 = vmatprep.subr.bf16.mxu0 0
    %1903 = vmatpush1.bf16.msra.mxu0 %v1607
    %1904 = vmatprep.mubr.bf16.mxu0 %v788
    %1905 = vmatmul.mubr.bf16.gmra.mrb[0].mxu0 %v787
    %v1906 = vpop.f32.mrb[0].mxu0
    %v1907 = vadd.f32 %v1867, %v1906
    %v1908 = vpop.f32.mrb[0].mxu0
    %v1909 = vpop.f32.mrb[0].mxu0
    %v1910 = vpop.f32.mrb[0].mxu0
    %1911 = vdwg.mxu0
    %1912 = vmatprep.subr.bf16.mxu0 0
    %1913 = vmatpush1.bf16.msra.mxu0 %v1608
    %1914 = vmatprep.subr.bf16.mxu0 0
    %1915 = vmatpush1.bf16.msra.mxu0 %v1609
    %1916 = vmatprep.subr.bf16.mxu0 0
    %1917 = vmatpush1.bf16.msra.mxu0 %v1610
    %1918 = vmatprep.subr.bf16.mxu0 0
    %1919 = vmatpush1.bf16.msra.mxu0 %v1611
    %1920 = vmatprep.subr.bf16.mxu0 0
    %1921 = vmatpush1.bf16.msra.mxu0 %v1612
    %1922 = vmatprep.subr.bf16.mxu0 0
    %1923 = vmatpush1.bf16.msra.mxu0 %v1613
    %1924 = vmatprep.subr.bf16.mxu0 0
    %1925 = vmatpush1.bf16.msra.mxu0 %v1614
    %1926 = vmatprep.subr.bf16.mxu0 0
    %1927 = vmatpush1.bf16.msra.mxu0 %v1615
    %1928 = vmatprep.subr.bf16.mxu0 0
    %1929 = vmatpush1.bf16.msra.mxu0 %v1616
    %1930 = vmatprep.subr.bf16.mxu0 0
    %1931 = vmatpush1.bf16.msra.mxu0 %v1617
    %1932 = vmatprep.subr.bf16.mxu0 0
    %1933 = vmatpush1.bf16.msra.mxu0 %v1618
    %1934 = vmatprep.subr.bf16.mxu0 0
    %1935 = vmatpush1.bf16.msra.mxu0 %v1619
    %1936 = vmatprep.subr.bf16.mxu0 0
    %1937 = vmatpush1.bf16.msra.mxu0 %v1620
    %1938 = vmatprep.subr.bf16.mxu0 0
    %1939 = vmatpush1.bf16.msra.mxu0 %v1621
    %1940 = vmatprep.subr.bf16.mxu0 0
    %1941 = vmatpush1.bf16.msra.mxu0 %v1622
    %1942 = vmatprep.subr.bf16.mxu0 0
    %1943 = vmatpush1.bf16.msra.mxu0 %v1623
    %1944 = vmatprep.mubr.bf16.mxu0 %v790
    %1945 = vmatmul.mubr.bf16.gmra.mrb[0].mxu0 %v789
    %v1946 = vpop.f32.mrb[0].mxu0
    %v1947 = vadd.f32 %v1907, %v1946
    %v1948 = vpop.f32.mrb[0].mxu0
    %v1949 = vpop.f32.mrb[0].mxu0
    %v1950 = vpop.f32.mrb[0].mxu0
    %1951 = vdwg.mxu0
    %1952 = vmatprep.subr.bf16.mxu0 0
    %1953 = vmatpush1.bf16.msra.mxu0 %v1624
    %1954 = vmatprep.subr.bf16.mxu0 0
    %1955 = vmatpush1.bf16.msra.mxu0 %v1625
    %1956 = vmatprep.subr.bf16.mxu0 0
    %1957 = vmatpush1.bf16.msra.mxu0 %v1626
    %1958 = vmatprep.subr.bf16.mxu0 0
    %1959 = vmatpush1.bf16.msra.mxu0 %v1627
    %1960 = vmatprep.subr.bf16.mxu0 0
    %1961 = vmatpush1.bf16.msra.mxu0 %v1628
    %1962 = vmatprep.subr.bf16.mxu0 0
    %1963 = vmatpush1.bf16.msra.mxu0 %v1629
    %1964 = vmatprep.subr.bf16.mxu0 0
    %1965 = vmatpush1.bf16.msra.mxu0 %v1630
    %1966 = vmatprep.subr.bf16.mxu0 0
    %1967 = vmatpush1.bf16.msra.mxu0 %v1631
    %1968 = vmatprep.subr.bf16.mxu0 0
    %1969 = vmatpush1.bf16.msra.mxu0 %v1632
    %1970 = vmatprep.subr.bf16.mxu0 0
    %1971 = vmatpush1.bf16.msra.mxu0 %v1633
    %1972 = vmatprep.subr.bf16.mxu0 0
    %1973 = vmatpush1.bf16.msra.mxu0 %v1634
    %1974 = vmatprep.subr.bf16.mxu0 0
    %1975 = vmatpush1.bf16.msra.mxu0 %v1635
    %1976 = vmatprep.subr.bf16.mxu0 0
    %1977 = vmatpush1.bf16.msra.mxu0 %v1636
    %1978 = vmatprep.subr.bf16.mxu0 0
    %1979 = vmatpush1.bf16.msra.mxu0 %v1637
    %1980 = vmatprep.subr.bf16.mxu0 0
    %1981 = vmatpush1.bf16.msra.mxu0 %v1638
    %1982 = vmatprep.subr.bf16.mxu0 0
    %1983 = vmatpush1.bf16.msra.mxu0 %v1639
    %1984 = vmatprep.mubr.bf16.mxu0 %v792
    %1985 = vmatmul.mubr.bf16.gmra.mrb[0].mxu0 %v791
    %v1986 = vpop.f32.mrb[0].mxu0
    %v1987 = vadd.f32 %v1947, %v1986
    %v1988 = vpop.f32.mrb[0].mxu0
    %v1989 = vpop.f32.mrb[0].mxu0
    %v1990 = vpop.f32.mrb[0].mxu0
    %1991 = vdwg.mxu0
    %1992 = vmatprep.subr.bf16.mxu0 0
    %1993 = vmatpush1.bf16.msra.mxu0 %v1640
    %1994 = vmatprep.subr.bf16.mxu0 0
    %1995 = vmatpush1.bf16.msra.mxu0 %v1641
    %1996 = vmatprep.subr.bf16.mxu0 0
    %1997 = vmatpush1.bf16.msra.mxu0 %v1642
    %1998 = vmatprep.subr.bf16.mxu0 0
    %1999 = vmatpush1.bf16.msra.mxu0 %v1643
    %2000 = vmatprep.subr.bf16.mxu0 0
    %2001 = vmatpush1.bf16.msra.mxu0 %v1644
    %2002 = vmatprep.subr.bf16.mxu0 0
    %2003 = vmatpush1.bf16.msra.mxu0 %v1645
    %2004 = vmatprep.subr.bf16.mxu0 0
    %2005 = vmatpush1.bf16.msra.mxu0 %v1646
    %2006 = vmatprep.subr.bf16.mxu0 0
    %2007 = vmatpush1.bf16.msra.mxu0 %v1647
    %2008 = vmatprep.subr.bf16.mxu0 0
    %2009 = vmatpush1.bf16.msra.mxu0 %v1648
    %2010 = vmatprep.subr.bf16.mxu0 0
    %2011 = vmatpush1.bf16.msra.mxu0 %v1649
    %2012 = vmatprep.subr.bf16.mxu0 0
    %2013 = vmatpush1.bf16.msra.mxu0 %v1650
    %2014 = vmatprep.subr.bf16.mxu0 0
    %2015 = vmatpush1.bf16.msra.mxu0 %v1651
    %2016 = vmatprep.subr.bf16.mxu0 0
    %2017 = vmatpush1.bf16.msra.mxu0 %v1652
    %2018 = vmatprep.subr.bf16.mxu0 0
    %2019 = vmatpush1.bf16.msra.mxu0 %v1653
    %2020 = vmatprep.subr.bf16.mxu0 0
    %2021 = vmatpush1.bf16.msra.mxu0 %v1654
    %2022 = vmatprep.subr.bf16.mxu0 0
    %2023 = vmatpush1.bf16.msra.mxu0 %v1655
    %2024 = vmatprep.mubr.bf16.mxu0 %v794
    %2025 = vmatmul.mubr.bf16.gmra.mrb[0].mxu0 %v793
    %v2026 = vpop.f32.mrb[0].mxu0
    %v2027 = vadd.f32 %v1987, %v2026
    %v2028 = vpop.f32.mrb[0].mxu0
    %v2029 = vpop.f32.mrb[0].mxu0
    %v2030 = vpop.f32.mrb[0].mxu0
    %2031 = vdwg.mxu0
    %2032 = vmatprep.subr.bf16.mxu0 0
    %2033 = vmatpush1.bf16.msra.mxu0 %v1656
    %2034 = vmatprep.subr.bf16.mxu0 0
    %2035 = vmatpush1.bf16.msra.mxu0 %v1657
    %2036 = vmatprep.subr.bf16.mxu0 0
    %2037 = vmatpush1.bf16.msra.mxu0 %v1658
    %2038 = vmatprep.subr.bf16.mxu0 0
    %2039 = vmatpush1.bf16.msra.mxu0 %v1659
    %2040 = vmatprep.subr.bf16.mxu0 0
    %2041 = vmatpush1.bf16.msra.mxu0 %v1660
    %2042 = vmatprep.subr.bf16.mxu0 0
    %2043 = vmatpush1.bf16.msra.mxu0 %v1661
    %2044 = vmatprep.subr.bf16.mxu0 0
    %2045 = vmatpush1.bf16.msra.mxu0 %v1662
    %2046 = vmatprep.subr.bf16.mxu0 0
    %2047 = vmatpush1.bf16.msra.mxu0 %v1663
    %2048 = vmatprep.subr.bf16.mxu0 0
    %2049 = vmatpush1.bf16.msra.mxu0 %v1664
    %2050 = vmatprep.subr.bf16.mxu0 0
    %2051 = vmatpush1.bf16.msra.mxu0 %v1665
    %2052 = vmatprep.subr.bf16.mxu0 0
    %2053 = vmatpush1.bf16.msra.mxu0 %v1666
    %2054 = vmatprep.subr.bf16.mxu0 0
    %2055 = vmatpush1.bf16.msra.mxu0 %v1667
    %2056 = vmatprep.subr.bf16.mxu0 0
    %2057 = vmatpush1.bf16.msra.mxu0 %v1668
    %2058 = vmatprep.subr.bf16.mxu0 0
    %2059 = vmatpush1.bf16.msra.mxu0 %v1669
    %2060 = vmatprep.subr.bf16.mxu0 0
    %2061 = vmatpush1.bf16.msra.mxu0 %v1670
    %2062 = vmatprep.subr.bf16.mxu0 0
    %2063 = vmatpush1.bf16.msra.mxu0 %v1671
    %2064 = vmatprep.mubr.bf16.mxu0 %v796
    %2065 = vmatmul.mubr.bf16.gmra.mrb[0].mxu0 %v795
    %v2066 = vpop.f32.mrb[0].mxu0
    %v2067 = vadd.f32 %v2027, %v2066
    %v2068 = vpop.f32.mrb[0].mxu0
    %v2069 = vpop.f32.mrb[0].mxu0
    %v2070 = vpop.f32.mrb[0].mxu0
    %2071 = vdwg.mxu0
    %2072 = vmatprep.subr.bf16.mxu0 0
    %2073 = vmatpush1.bf16.msra.mxu0 %v1672
    %2074 = vmatprep.subr.bf16.mxu0 0
    %2075 = vmatpush1.bf16.msra.mxu0 %v1673
    %2076 = vmatprep.subr.bf16.mxu0 0
    %2077 = vmatpush1.bf16.msra.mxu0 %v1674
    %2078 = vmatprep.subr.bf16.mxu0 0
    %2079 = vmatpush1.bf16.msra.mxu0 %v1675
    %2080 = vmatprep.subr.bf16.mxu0 0
    %2081 = vmatpush1.bf16.msra.mxu0 %v1676
    %2082 = vmatprep.subr.bf16.mxu0 0
    %2083 = vmatpush1.bf16.msra.mxu0 %v1677
    %2084 = vmatprep.subr.bf16.mxu0 0
    %2085 = vmatpush1.bf16.msra.mxu0 %v1678
    %2086 = vmatprep.subr.bf16.mxu0 0
    %2087 = vmatpush1.bf16.msra.mxu0 %v1679
    %2088 = vmatprep.subr.bf16.mxu0 0
    %2089 = vmatpush1.bf16.msra.mxu0 %v1680
    %2090 = vmatprep.subr.bf16.mxu0 0
    %2091 = vmatpush1.bf16.msra.mxu0 %v1681
    %2092 = vmatprep.subr.bf16.mxu0 0
    %2093 = vmatpush1.bf16.msra.mxu0 %v1682
    %2094 = vmatprep.subr.bf16.mxu0 0
    %2095 = vmatpush1.bf16.msra.mxu0 %v1683
    %2096 = vmatprep.subr.bf16.mxu0 0
    %2097 = vmatpush1.bf16.msra.mxu0 %v1684
    %2098 = vmatprep.subr.bf16.mxu0 0
    %2099 = vmatpush1.bf16.msra.mxu0 %v1685
    %2100 = vmatprep.subr.bf16.mxu0 0
    %2101 = vmatpush1.bf16.msra.mxu0 %v1686
    %2102 = vmatprep.subr.bf16.mxu0 0
    %2103 = vmatpush1.bf16.msra.mxu0 %v1687
    %2104 = vmatprep.mubr.bf16.mxu0 %v798
    %2105 = vmatmul.mubr.bf16.gmra.mrb[0].mxu0 %v797
    %v2106 = vpop.f32.mrb[0].mxu0
    %v2107 = vadd.f32 %v2067, %v2106
    %v2108 = vpop.f32.mrb[0].mxu0
    %v2109 = vpop.f32.mrb[0].mxu0
    %v2110 = vpop.f32.mrb[0].mxu0
    %2111 = vdwg.mxu0
    %2112 = vmatprep.subr.bf16.mxu0 0
    %2113 = vmatpush1.bf16.msra.mxu0 %v1688
    %2114 = vmatprep.subr.bf16.mxu0 0
    %2115 = vmatpush1.bf16.msra.mxu0 %v1689
    %2116 = vmatprep.subr.bf16.mxu0 0
    %2117 = vmatpush1.bf16.msra.mxu0 %v1690
    %2118 = vmatprep.subr.bf16.mxu0 0
    %2119 = vmatpush1.bf16.msra.mxu0 %v1691
    %2120 = vmatprep.subr.bf16.mxu0 0
    %2121 = vmatpush1.bf16.msra.mxu0 %v1692
    %2122 = vmatprep.subr.bf16.mxu0 0
    %2123 = vmatpush1.bf16.msra.mxu0 %v1693
    %2124 = vmatprep.subr.bf16.mxu0 0
    %2125 = vmatpush1.bf16.msra.mxu0 %v1694
    %2126 = vmatprep.subr.bf16.mxu0 0
    %2127 = vmatpush1.bf16.msra.mxu0 %v1695
    %2128 = vmatprep.subr.bf16.mxu0 0
    %2129 = vmatpush1.bf16.msra.mxu0 %v1696
    %2130 = vmatprep.subr.bf16.mxu0 0
    %2131 = vmatpush1.bf16.msra.mxu0 %v1697
    %2132 = vmatprep.subr.bf16.mxu0 0
    %2133 = vmatpush1.bf16.msra.mxu0 %v1698
    %2134 = vmatprep.subr.bf16.mxu0 0
    %2135 = vmatpush1.bf16.msra.mxu0 %v1699
    %2136 = vmatprep.subr.bf16.mxu0 0
    %2137 = vmatpush1.bf16.msra.mxu0 %v1700
    %2138 = vmatprep.subr.bf16.mxu0 0
    %2139 = vmatpush1.bf16.msra.mxu0 %v1701
    %2140 = vmatprep.subr.bf16.mxu0 0
    %2141 = vmatpush1.bf16.msra.mxu0 %v1702
    %2142 = vmatprep.subr.bf16.mxu0 0
    %2143 = vmatpush1.bf16.msra.mxu0 %v1703
    %2144 = vmatprep.mubr.bf16.mxu0 %v800
    %2145 = vmatmul.mubr.bf16.gmra.mrb[0].mxu0 %v799
    %v2146 = vpop.f32.mrb[0].mxu0
    %v2147 = vadd.f32 %v2107, %v2146
    %v2148 = vpop.f32.mrb[0].mxu0
    %v2149 = vpop.f32.mrb[0].mxu0
    %v2150 = vpop.f32.mrb[0].mxu0
    %2151 = vdwg.mxu0
    %2152 = vst [vmem:[#allocation10] sm:$0xff] %v2147
    // Predicated region
    $region38: #{tpu_custom_call.1} parent=1 // pred_check
      _
    $region39: #{tpu_custom_call.1} parent=1 // pred_check_branch
      %2154 = sbr.rel (0) target = $region41
    $region40: #{tpu_custom_call.1} parent=1 // pred_region
      %s2156 = ssub.s32 128, 128
      %2157 = vsyncadd [#allocation4], %s2156
      %s2159 = sshll.u32 [#allocation10], 4
      %s2160 = int_to_ptr.vmem [resolvable:$true] %s2159
      %2162 = dma.vmem_to_hbm [thread:$0]  %s2160, 128, %s5, [#allocation4]
    $region41: #{tpu_custom_call.1} parent=1 // pred_fallthru
      _
    // Predicated region
    $region42: #{tpu_custom_call.1} parent=1 // pred_check
      _
    $region43: #{tpu_custom_call.1} parent=1 // pred_check_branch
      %2164 = sbr.rel (0) target = $region45
    $region44: #{tpu_custom_call.1} parent=1 // pred_region
      %2165 = dma.done [#allocation4], 128
    $region45: #{tpu_custom_call.1} parent=1 // pred_fallthru
      _
    %2166 = vsyncpa [#allocation3], 1
    %2167 = vsyncpa [#allocation6], 1
    %2168 = vsyncpa [#allocation9], 1
    %2169 = vsyncpa [#allocation4], 1

</llo_original>
